<compile_context>
chip_gen: v6e
topology: v6e:2x2x1
jax: 0.10.0
libtpu: 0.0.40
codegen_flags: <defaults>
</compile_context>

<pallas_src>
import jax
import jax.numpy as jnp
import numpy as np
from jax.experimental import pallas as pl
from jax.experimental.pallas import tpu as pltpu

LANE = 128  # classifier output padded to one full lane width


def fusion_kernel(vis_ref, txt_ref, w1v_ref, w1t_ref, b1_ref, w2_ref, b2_ref,
                  out_ref, acc_ref):
    k = pl.program_id(0)

    @pl.when(k == 0)
    def _init():
        acc_ref[...] = jnp.zeros_like(acc_ref)

    # Partial contraction over this Dv chunk: bf16 MXU matmul, f32 accumulate.
    acc_ref[...] += jnp.dot(vis_ref[...].astype(jnp.bfloat16), w1v_ref[...],
                            preferred_element_type=jnp.float32)

    @pl.when(k == pl.num_programs(0) - 1)
    def _finalize():
        # Sequence mean is folded into w1t (pre-scaled by 1/S) -> plain sum here.
        txt_sum = jnp.sum(txt_ref[...], axis=1).astype(jnp.bfloat16)      # (B, Dt)
        h = (acc_ref[...]
             + jnp.dot(txt_sum, w1t_ref[...],
                       preferred_element_type=jnp.float32)
             + b1_ref[...])                                               # (B, H) f32
        logits = (jnp.dot(h.astype(jnp.bfloat16), w2_ref[...],
                          preferred_element_type=jnp.float32)
                  + b2_ref[...])                                          # (B, 128)
        out_ref[...] = logits.astype(out_ref.dtype)


def prepare_head_params(w1, b1, w2, b2, *, visual_dim, seq_len):
    """One-time parameter prep (call once, NOT per forward):
       split w1, fold the 1/S mean into w1t, cast big weights to bf16,
       pad the classifier to a lane-dense 128-wide output."""
    Dv = visual_dim
    H = w1.shape[1]
    num_classes = w2.shape[1]

    w1v = w1[:Dv].astype(jnp.bfloat16)                              # (Dv, H)
    w1t = (w1[Dv:] * (1.0 / seq_len)).astype(jnp.bfloat16)          # (Dt, H)
    b1_2d = b1.reshape(1, H).astype(jnp.float32)                    # (1, H)
    w2_pad = jnp.zeros((H, LANE), jnp.bfloat16).at[:, :num_classes].set(
        w2.astype(jnp.bfloat16))                                    # (H, 128)
    b2_pad = jnp.zeros((1, LANE), jnp.float32).at[:, :num_classes].set(
        b2.astype(jnp.float32))                                     # (1, 128)
    return (w1v, w1t, b1_2d, w2_pad, b2_pad, num_classes)


def multimodal_head(vis, txt, params, *, tk=512):
    """Pallas equivalent of classifier(fc(cat(vis, txt.mean(1), dim=1)))."""
    w1v, w1t, b1_2d, w2_pad, b2_pad, num_classes = params
    B, Dv = vis.shape
    _, S, Dt = txt.shape
    H = w1v.shape[1]
    n_pad = w2_pad.shape[1]

    tk = min(tk, Dv)
    assert Dv % tk == 0 and tk % 128 == 0
    kv = Dv // tk

    flops = 2 * B * (Dv + Dt) * H + 2 * B * H * n_pad
    bytes_accessed = (
        2 * (w1v.size + w1t.size + w2_pad.size)          # bf16 weights
        + 4 * (vis.size + txt.size)                      # f32 activations
        + 4 * (b1_2d.size + b2_pad.size)                 # f32 biases
        + 4 * B * n_pad)                                 # f32 output

    grid_spec = pltpu.PrefetchScalarGridSpec(
        num_scalar_prefetch=0,
        grid=(kv,),
        in_specs=[
            pl.BlockSpec((B, tk), lambda k: (0, k)),        # vis chunk (pipelined)
            pl.BlockSpec((B, S, Dt), lambda k: (0, 0, 0)),  # txt (resident)
            pl.BlockSpec((tk, H), lambda k: (k, 0)),        # w1v chunk (pipelined)
            pl.BlockSpec((Dt, H), lambda k: (0, 0)),        # w1t (resident)
            pl.BlockSpec((1, H), lambda k: (0, 0)),         # b1
            pl.BlockSpec((H, n_pad), lambda k: (0, 0)),     # w2 (padded, lane-dense)
            pl.BlockSpec((1, n_pad), lambda k: (0, 0)),     # b2 (padded)
        ],
        out_specs=pl.BlockSpec((B, n_pad), lambda k: (0, 0)),
        scratch_shapes=[pltpu.VMEM((B, H), jnp.float32)],
    )

    out_padded = pl.pallas_call(
        fusion_kernel,
        out_shape=jax.ShapeDtypeStruct((B, n_pad), jnp.float32),
        grid_spec=grid_spec,
        compiler_params=pltpu.CompilerParams(
            dimension_semantics=("arbitrary",)),
        cost_estimate=pl.CostEstimate(flops=flops, transcendentals=0,
                                      bytes_accessed=bytes_accessed),
    )(vis, txt, w1v, w1t, b1_2d, w2_pad, b2_pad)

    return out_padded[:, :num_classes]


# ----------------------------------------------------------------------------
# Stand-in backbones (plain-JAX glue; the real visual/textual models are
# external pretrained networks and not part of this module's own parameters).
# ----------------------------------------------------------------------------
def visual_model_stub(image, wv):
    # TODO(synk): real visual_model is an external CNN (e.g. ResNet-50); stubbed
    # as flatten + linear projection to the 2048-d feature the module expects.
    B = image.shape[0]
    return image.reshape(B, -1) @ wv                                # (B, 2048)


def textual_model_stub(token_ids, emb_table):
    # TODO(synk): real textual_model is an external transformer; stubbed as an
    # embedding lookup producing last_hidden_state of shape (B, S, Dt).
    return emb_table[token_ids]                                     # (B, S, Dt)


if __name__ == "__main__":
    key = jax.random.PRNGKey(0)

    # Small shapes consistent with the module's forward.
    B, C, Hi, Wi = 2, 4, 16, 16        # image: NCHW
    S = 8                              # text sequence length
    Dv = 2048                          # visual_output_dim (hard-coded in module)
    Dt = 256                           # textual_model.config.hidden_size (small)
    HID = 512                          # hidden_size
    NUM_CLASSES = 3
    VOCAB = 100

    ks = jax.random.split(key, 8)
    image = jax.random.normal(ks[0], (B, C, Hi, Wi), jnp.float32)
    token_ids = jax.random.randint(ks[1], (B, S), 0, VOCAB)

    # Deterministic synthetic parameters (f32 "master" copies).
    wv = jax.random.normal(ks[2], (C * Hi * Wi, Dv), jnp.float32) * 0.02
    emb = jax.random.normal(ks[3], (VOCAB, Dt), jnp.float32) * 0.02
    w1 = jax.random.normal(ks[4], (Dv + Dt, HID), jnp.float32) * 0.02      # fc.weight.T
    b1 = jax.random.normal(ks[5], (HID,), jnp.float32) * 0.02              # fc.bias
    w2 = jax.random.normal(ks[6], (HID, NUM_CLASSES), jnp.float32) * 0.02  # classifier.weight.T
    b2 = jax.random.normal(ks[7], (NUM_CLASSES,), jnp.float32) * 0.02      # classifier.bias

    # One-time parameter prep (split / fold-mean / bf16 cast / lane padding).
    head_params = prepare_head_params(w1, b1, w2, b2,
                                      visual_dim=Dv, seq_len=S)

    # Backbone features (glue).
    vis = visual_model_stub(image, wv)            # (B, 2048) f32
    txt = textual_model_stub(token_ids, emb)      # (B, S, Dt) f32

    # Pallas fusion head.
    logits = multimodal_head(vis, txt, head_params)
    logits = jax.block_until_ready(logits)
    assert logits.shape == (B, NUM_CLASSES)

    # Pure-JAX f32 reference (original PyTorch semantics).
    txt_mean = txt.mean(axis=1)
    combined = jnp.concatenate([vis, txt_mean], axis=1)
    ref = (combined @ w1 + b1) @ w2 + b2
    # Tolerance loosened because the kernel uses bf16 weights/activations on the MXU.
    np.testing.assert_allclose(np.asarray(logits), np.asarray(ref),
                               rtol=2e-2, atol=2e-2)

    print("KERNEL_OK")
</pallas_src>

<mosaic_0001>
module attributes {stable_mosaic.version = 11 : i64} {
  func.func @fusion_kernel(%arg0: i32, %arg1: memref<2x512xf32, #tpu.memory_space<vmem>>, %arg2: memref<2x8x256xf32, #tpu.memory_space<vmem>>, %arg3: memref<512x512xbf16, #tpu.memory_space<vmem>>, %arg4: memref<256x512xbf16, #tpu.memory_space<vmem>>, %arg5: memref<1x512xf32, #tpu.memory_space<vmem>>, %arg6: memref<512x128xbf16, #tpu.memory_space<vmem>>, %arg7: memref<1x128xf32, #tpu.memory_space<vmem>>, %arg8: memref<2x128xf32, #tpu.memory_space<vmem>>, %arg9: memref<2x512xf32, #tpu.memory_space<vmem>>) attributes {dimension_semantics = [#tpu.dimension_semantics<arbitrary>], iteration_bounds = array<i64: 4>, scalar_prefetch = 0 : i64, scratch_operands = 1 : i64, tpu.core_type = #tpu.core_type<tc>, window_params = [{transform_indices = @transform_0, window_bounds = array<i64: 2, 512>}, {pipeline_mode = #tpu.pipeline_mode<synchronous>, transform_indices = @transform_1, window_bounds = array<i64: 2, 8, 256>}, {transform_indices = @transform_2, window_bounds = array<i64: 512, 512>}, {pipeline_mode = #tpu.pipeline_mode<synchronous>, transform_indices = @transform_3, window_bounds = array<i64: 256, 512>}, {pipeline_mode = #tpu.pipeline_mode<synchronous>, transform_indices = @transform_4, window_bounds = array<i64: 1, 512>}, {pipeline_mode = #tpu.pipeline_mode<synchronous>, transform_indices = @transform_5, window_bounds = array<i64: 512, 128>}, {pipeline_mode = #tpu.pipeline_mode<synchronous>, transform_indices = @transform_6, window_bounds = array<i64: 1, 128>}, {pipeline_mode = #tpu.pipeline_mode<synchronous>, transform_indices = @transform_7, window_bounds = array<i64: 2, 128>}]} {
    %c0_i32 = arith.constant 0 : i32
    %0 = arith.cmpi eq, %arg0, %c0_i32 : i32
    %1 = arith.extui %0 : i1 to i32
    %c0_i32_0 = arith.constant 0 : i32
    %2 = arith.cmpi ne, %1, %c0_i32_0 : i32
    scf.if %2 {
      %cst_9 = arith.constant 0.000000e+00 : f32
      %13 = vector.broadcast %cst_9 : f32 to vector<2x512xf32>
      %c0_10 = arith.constant 0 : index
      %c0_11 = arith.constant 0 : index
      %14 = vector.load %arg9[%c0_10, %c0_11] : memref<2x512xf32, #tpu.memory_space<vmem>>, vector<2x512xf32>
      tpu.vector_store %arg9[%c0_10, %c0_11], %13 {strides = array<i32>} : memref<2x512xf32, #tpu.memory_space<vmem>>, vector<2x512xf32>,
    } else {
    }
    %c0 = arith.constant 0 : index
    %c0_1 = arith.constant 0 : index
    %3 = vector.load %arg9[%c0, %c0_1] : memref<2x512xf32, #tpu.memory_space<vmem>>, vector<2x512xf32>
    %c0_2 = arith.constant 0 : index
    %c0_3 = arith.constant 0 : index
    %4 = vector.load %arg1[%c0_2, %c0_3] : memref<2x512xf32, #tpu.memory_space<vmem>>, vector<2x512xf32>
    %5 = arith.truncf %4 : vector<2x512xf32> to vector<2x512xbf16>
    %c0_4 = arith.constant 0 : index
    %c0_5 = arith.constant 0 : index
    %6 = vector.load %arg3[%c0_4, %c0_5] : memref<512x512xbf16, #tpu.memory_space<vmem>>, vector<512x512xbf16>
    %cst = arith.constant dense<0.000000e+00> : vector<2x512xf32>
    %7 = tpu.matmul %5, %6, %cst {dimension_numbers = #tpu.dot_dimension_numbers<[1], [0], [0], [1], [0, 0, 1, 1], [], []>} : vector<2x512xbf16>, vector<512x512xbf16>, vector<2x512xf32> -> vector<2x512xf32>
    %8 = arith.addf %3, %7 : vector<2x512xf32>
    %c0_6 = arith.constant 0 : index
    %c0_7 = arith.constant 0 : index
    %9 = vector.load %arg9[%c0_6, %c0_7] : memref<2x512xf32, #tpu.memory_space<vmem>>, vector<2x512xf32>
    tpu.vector_store %arg9[%c0_6, %c0_7], %8 {strides = array<i32>} : memref<2x512xf32, #tpu.memory_space<vmem>>, vector<2x512xf32>,
    %c3_i32 = arith.constant 3 : i32
    %10 = arith.cmpi eq, %arg0, %c3_i32 : i32
    %11 = arith.extui %10 : i1 to i32
    %c0_i32_8 = arith.constant 0 : i32
    %12 = arith.cmpi ne, %11, %c0_i32_8 : i32
    scf.if %12 {
      %c0_9 = arith.constant 0 : index
      %c0_10 = arith.constant 0 : index
      %c0_11 = arith.constant 0 : index
      %13 = vector.load %arg2[%c0_9, %c0_10, %c0_11] : memref<2x8x256xf32, #tpu.memory_space<vmem>>, vector<2x8x256xf32>
      %cst_12 = arith.constant dense<0.000000e+00> : vector<2x256xf32>
      %14 = vector.multi_reduction <add>, %13, %cst_12 [1] : vector<2x8x256xf32> to vector<2x256xf32>
      %15 = arith.truncf %14 : vector<2x256xf32> to vector<2x256xbf16>
      %c0_13 = arith.constant 0 : index
      %c0_14 = arith.constant 0 : index
      %16 = vector.load %arg9[%c0_13, %c0_14] : memref<2x512xf32, #tpu.memory_space<vmem>>, vector<2x512xf32>
      %c0_15 = arith.constant 0 : index
      %c0_16 = arith.constant 0 : index
      %17 = vector.load %arg4[%c0_15, %c0_16] : memref<256x512xbf16, #tpu.memory_space<vmem>>, vector<256x512xbf16>
      %cst_17 = arith.constant dense<0.000000e+00> : vector<2x512xf32>
      %18 = tpu.matmul %15, %17, %cst_17 {dimension_numbers = #tpu.dot_dimension_numbers<[1], [0], [0], [1], [0, 0, 1, 1], [], []>} : vector<2x256xbf16>, vector<256x512xbf16>, vector<2x512xf32> -> vector<2x512xf32>
      %19 = arith.addf %16, %18 : vector<2x512xf32>
      %c0_18 = arith.constant 0 : index
      %c0_19 = arith.constant 0 : index
      %20 = vector.load %arg5[%c0_18, %c0_19] : memref<1x512xf32, #tpu.memory_space<vmem>>, vector<1x512xf32>
      %21 = vector.broadcast %20 : vector<1x512xf32> to vector<2x512xf32>
      %22 = arith.addf %19, %21 : vector<2x512xf32>
      %23 = arith.truncf %22 : vector<2x512xf32> to vector<2x512xbf16>
      %c0_20 = arith.constant 0 : index
      %c0_21 = arith.constant 0 : index
      %24 = vector.load %arg6[%c0_20, %c0_21] : memref<512x128xbf16, #tpu.memory_space<vmem>>, vector<512x128xbf16>
      %cst_22 = arith.constant dense<0.000000e+00> : vector<2x128xf32>
      %25 = tpu.matmul %23, %24, %cst_22 {dimension_numbers = #tpu.dot_dimension_numbers<[1], [0], [0], [1], [0, 0, 1, 1], [], []>} : vector<2x512xbf16>, vector<512x128xbf16>, vector<2x128xf32> -> vector<2x128xf32>
      %c0_23 = arith.constant 0 : index
      %c0_24 = arith.constant 0 : index
      %26 = vector.load %arg7[%c0_23, %c0_24] : memref<1x128xf32, #tpu.memory_space<vmem>>, vector<1x128xf32>
      %27 = vector.broadcast %26 : vector<1x128xf32> to vector<2x128xf32>
      %28 = arith.addf %25, %27 : vector<2x128xf32>
      %c0_25 = arith.constant 0 : index
      %c0_26 = arith.constant 0 : index
      %29 = vector.load %arg8[%c0_25, %c0_26] : memref<2x128xf32, #tpu.memory_space<vmem>>, vector<2x128xf32>
      tpu.vector_store %arg8[%c0_25, %c0_26], %28 {strides = array<i32>} : memref<2x128xf32, #tpu.memory_space<vmem>>, vector<2x128xf32>,
    } else {
    }
    return
  }
  func.func @transform_0(%arg0: i32) -> (i32, i32) {
    %c0_i32 = arith.constant 0 : i32
    %c0_i32_0 = arith.constant 0 : i32
    return %c0_i32, %arg0 : i32, i32
  }
  func.func @transform_1(%arg0: i32) -> (i32, i32, i32) {
    %c0_i32 = arith.constant 0 : i32
    %c0_i32_0 = arith.constant 0 : i32
    %c0_i32_1 = arith.constant 0 : i32
    %c0_i32_2 = arith.constant 0 : i32
    return %c0_i32, %c0_i32_0, %c0_i32_1 : i32, i32, i32
  }
  func.func @transform_2(%arg0: i32) -> (i32, i32) {
    %c0_i32 = arith.constant 0 : i32
    %c0_i32_0 = arith.constant 0 : i32
    return %arg0, %c0_i32 : i32, i32
  }
  func.func @transform_3(%arg0: i32) -> (i32, i32) {
    %c0_i32 = arith.constant 0 : i32
    %c0_i32_0 = arith.constant 0 : i32
    %c0_i32_1 = arith.constant 0 : i32
    return %c0_i32, %c0_i32_0 : i32, i32
  }
  func.func @transform_4(%arg0: i32) -> (i32, i32) {
    %c0_i32 = arith.constant 0 : i32
    %c0_i32_0 = arith.constant 0 : i32
    %c0_i32_1 = arith.constant 0 : i32
    return %c0_i32, %c0_i32_0 : i32, i32
  }
  func.func @transform_5(%arg0: i32) -> (i32, i32) {
    %c0_i32 = arith.constant 0 : i32
    %c0_i32_0 = arith.constant 0 : i32
    %c0_i32_1 = arith.constant 0 : i32
    return %c0_i32, %c0_i32_0 : i32, i32
  }
  func.func @transform_6(%arg0: i32) -> (i32, i32) {
    %c0_i32 = arith.constant 0 : i32
    %c0_i32_0 = arith.constant 0 : i32
    %c0_i32_1 = arith.constant 0 : i32
    return %c0_i32, %c0_i32_0 : i32, i32
  }
  func.func @transform_7(%arg0: i32) -> (i32, i32) {
    %c0_i32 = arith.constant 0 : i32
    %c0_i32_0 = arith.constant 0 : i32
    %c0_i32_1 = arith.constant 0 : i32
    return %c0_i32, %c0_i32_0 : i32, i32
  }
}

</mosaic_0001>

<llo_original>
// kernel: tpu_custom_call.1
$region0: #{tpu_custom_call.1}
  #allocation0 [shape = 'u32[]', space=smem, size = 0x4, offset = 0x4, fixed_abs, tag = 'smem constant byte address 0x4 - core index']
  #allocation1 [shape = 'u32[144,128]{1,0:T(1,128)}', space=vmem, size = 0x12000, scoped, tag = 'internal scratch']
  #allocation2 [shape = 'f32[2,512]{1,0:T(2,128)}', space=vmem, size = 0x1000, scoped, tag = 'scratch operand']
  %s0 = inlined_call_operand.hbm [shape: f32[2,2048], index: 0, kind: input, shape index: {}]
  %s1 = inlined_call_operand.hbm [shape: f32[2,8,256], index: 1, kind: input, shape index: {}]
  %s2 = inlined_call_operand.hbm [shape: bf16[2048,512], index: 2, kind: input, shape index: {}]
  %s3 = inlined_call_operand.hbm [shape: bf16[256,512], index: 3, kind: input, shape index: {}]
  %s4 = inlined_call_operand.hbm [shape: f32[1,512], index: 4, kind: input, shape index: {}]
  %s5 = inlined_call_operand.hbm [shape: bf16[512,128], index: 5, kind: input, shape index: {}]
  %s6 = inlined_call_operand.hbm [shape: f32[1,128], index: 6, kind: input, shape index: {}]
  %s7 = inlined_call_operand.hbm [shape: f32[2,128], index: 7, kind: output, shape index: {}]
  %s8 = sld [smem:[#allocation0]]
  $region97: #{tpu_custom_call.1} parent=0
    _
  %s10 = ssub.s32 1, %s8
  %s11 = scalar_select 0, %s10, %s8
  $region1: #{tpu_custom_call.1} parent=0
    #allocation3 [shape = 'u8[8192]{0}', space=vmem, size = 0x2000, scoped, tag = 'input window, operand 0']
    #allocation4 [shape = 's32[2]{0}', space=sflag, size = 0x8, scoped, tag = 'scoped memory for tpu_custom_call.1']
    #allocation5 [shape = 's32[2]{0}', space=sflag, size = 0x8, scoped, tag = 'scoped memory for tpu_custom_call.1']
    #allocation6 [shape = 'u8[16384]{0}', space=vmem, size = 0x4000, scoped, tag = 'input window, operand 1, single buffered']
    #allocation7 [shape = 's32[1]{0}', space=sflag, size = 0x4, scoped, tag = 'scoped memory for tpu_custom_call.1']
    #allocation8 [shape = 'u8[1048576]{0}', space=vmem, size = 0x100000, scoped, tag = 'input window, operand 2']
    #allocation9 [shape = 'u8[262144]{0}', space=vmem, size = 0x40000, scoped, tag = 'input window, operand 3, single buffered']
    #allocation10 [shape = 'u8[2048]{0}', space=vmem, size = 0x800, scoped, tag = 'input window, operand 4, single buffered']
    #allocation11 [shape = 's32[1]{0}', space=sflag, size = 0x4, scoped, tag = 'scoped memory for tpu_custom_call.1']
    #allocation12 [shape = 'u8[131072]{0}', space=vmem, size = 0x20000, scoped, tag = 'input window, operand 5, single buffered']
    #allocation13 [shape = 'u8[512]{0}', space=vmem, size = 0x400, scoped, tag = 'input window, operand 6, single buffered']
    #allocation14 [shape = 's32[1]{0}', space=sflag, size = 0x4, scoped, tag = 'scoped memory for tpu_custom_call.1']
    #allocation15 [shape = 'u8[1024]{0}', space=vmem, size = 0x400, scoped, tag = 'output window, operand 0, single buffered']
    %12 = vsyncpa [#allocation4], 0
    %s13 = scalar_lea.sflag [#allocation4], 1
    %14 = vsyncpa %s13, 0
    %15 = vsyncpa [#allocation7], 0
    %16 = vsyncpa [#allocation11], 0
    %17 = vsyncpa [#allocation14], 0
    %18 = vsyncpa [#allocation5], 0
    loop: start=0, step=1, limit=6
    $region2: #{tpu_custom_call.1} parent=1 // loop_pre_header
      _
    $region3: #{tpu_custom_call.1} parent=1 // loop_header
      %s20 = sphi 0, %s24
      %p21 = scmp.ge.s32.totalorder %s20, 6
      %s30 = sphi 0, %s32
      %s33 = sphi 0, %s30
      %s34 = sphi 0, %s33
      %s50 = sphi 0, %s34
      %s54 = sphi 0, %s54
      %s56 = sphi 0, %s54
      %s57 = sphi 0, %s56
      %s71 = sphi 0, %s57
      %s77 = sphi 0, %s79
      %s80 = sphi 0, %s77
      %s81 = sphi 0, %s80
      %s97 = sphi 0, %s81
      %s101 = sphi 0, %s101
      %s103 = sphi 0, %s101
      %s104 = sphi 0, %s103
      %s118 = sphi 0, %s104
      %s122 = sphi 0, %s122
      %s124 = sphi 0, %s122
      %s125 = sphi 0, %s124
      %s139 = sphi 0, %s125
      %s143 = sphi 0, %s143
      %s145 = sphi 0, %s143
      %s146 = sphi 0, %s145
      %s160 = sphi 0, %s146
      %s164 = sphi 0, %s164
      %s166 = sphi 0, %s164
      %s167 = sphi 0, %s166
      %s181 = sphi 0, %s167
      %s185 = sphi 0, %s185
      %s187 = sphi 0, %s185
      %s188 = sphi 0, %s187
      %s202 = sphi 0, %s188
    $region4: #{tpu_custom_call.1} parent=1 // loop_header_branch
      %23 = sbr.rel (%p21) target = $region8
    $region5: #{tpu_custom_call.1} parent=1 // loop_body
      %s25 = ssub.s32 %s20, 1
      %s26 = ssub.s32 %s20, 2
      %s27 = sadd.s32 %s20, 1
      %s28 = ssub.s32 %s20, %s27
      %p29 = scmp.eq.s32.totalorder %s28, 0
      %s31 = sadd.s32 %s30, 1
      %s32 = scalar_select %p29, %s30, %s31
      %p35 = pneg %p29
      %p36 = scmp.eq.s32.totalorder %s20, 3
      %p37 = por %p35, %p36
      %p38 = scmp.ne.s32.totalorder %s30, %s33
      %p39 = scmp.eq.s32.totalorder %s20, 0
      %p40 = por %p38, %p39
      %p41 = scmp.ne.s32.totalorder %s30, %s33
      %p42 = scmp.eq.s32.totalorder %s25, 3
      %p43 = por %p41, %p42
      %p44 = scmp.ne.s32.totalorder %s33, %s34
      %p45 = scmp.eq.s32.totalorder %s25, 0
      %p46 = por %p44, %p45
      %p47 = scmp.ne.s32.totalorder %s33, %s34
      %p48 = scmp.eq.s32.totalorder %s26, 3
      %p49 = por %p47, %p48
      %p51 = scmp.ne.s32.totalorder %s34, %s50
      %p52 = scmp.eq.s32.totalorder %s26, 0
      %p53 = por %p51, %p52
      %s55 = sadd.s32 %s54, 1
      %p58 = scmp.eq.s32.totalorder %s20, 3
      %p59 = scmp.ne.s32.totalorder %s54, %s56
      %p60 = scmp.eq.s32.totalorder %s20, 0
      %p61 = por %p59, %p60
      %p62 = scmp.ne.s32.totalorder %s54, %s56
      %p63 = scmp.eq.s32.totalorder %s25, 3
      %p64 = por %p62, %p63
      %p65 = scmp.ne.s32.totalorder %s56, %s57
      %p66 = scmp.eq.s32.totalorder %s25, 0
      %p67 = por %p65, %p66
      %p68 = scmp.ne.s32.totalorder %s56, %s57
      %p69 = scmp.eq.s32.totalorder %s26, 3
      %p70 = por %p68, %p69
      %p72 = scmp.ne.s32.totalorder %s57, %s71
      %p73 = scmp.eq.s32.totalorder %s26, 0
      %p74 = por %p72, %p73
      %s75 = ssub.s32 %s20, %s27
      %p76 = scmp.eq.s32.totalorder %s75, 0
      %s78 = sadd.s32 %s77, 1
      %s79 = scalar_select %p76, %s77, %s78
      %p82 = pneg %p76
      %p83 = scmp.eq.s32.totalorder %s20, 3
      %p84 = por %p82, %p83
      %p85 = scmp.ne.s32.totalorder %s77, %s80
      %p86 = scmp.eq.s32.totalorder %s20, 0
      %p87 = por %p85, %p86
      %p88 = scmp.ne.s32.totalorder %s77, %s80
      %p89 = scmp.eq.s32.totalorder %s25, 3
      %p90 = por %p88, %p89
      %p91 = scmp.ne.s32.totalorder %s80, %s81
      %p92 = scmp.eq.s32.totalorder %s25, 0
      %p93 = por %p91, %p92
      %p94 = scmp.ne.s32.totalorder %s80, %s81
      %p95 = scmp.eq.s32.totalorder %s26, 3
      %p96 = por %p94, %p95
      %p98 = scmp.ne.s32.totalorder %s81, %s97
      %p99 = scmp.eq.s32.totalorder %s26, 0
      %p100 = por %p98, %p99
      %s102 = sadd.s32 %s101, 1
      %p105 = scmp.eq.s32.totalorder %s20, 3
      %p106 = scmp.ne.s32.totalorder %s101, %s103
      %p107 = scmp.eq.s32.totalorder %s20, 0
      %p108 = por %p106, %p107
      %p109 = scmp.ne.s32.totalorder %s101, %s103
      %p110 = scmp.eq.s32.totalorder %s25, 3
      %p111 = por %p109, %p110
      %p112 = scmp.ne.s32.totalorder %s103, %s104
      %p113 = scmp.eq.s32.totalorder %s25, 0
      %p114 = por %p112, %p113
      %p115 = scmp.ne.s32.totalorder %s103, %s104
      %p116 = scmp.eq.s32.totalorder %s26, 3
      %p117 = por %p115, %p116
      %p119 = scmp.ne.s32.totalorder %s104, %s118
      %p120 = scmp.eq.s32.totalorder %s26, 0
      %p121 = por %p119, %p120
      %s123 = sadd.s32 %s122, 1
      %p126 = scmp.eq.s32.totalorder %s20, 3
      %p127 = scmp.ne.s32.totalorder %s122, %s124
      %p128 = scmp.eq.s32.totalorder %s20, 0
      %p129 = por %p127, %p128
      %p130 = scmp.ne.s32.totalorder %s122, %s124
      %p131 = scmp.eq.s32.totalorder %s25, 3
      %p132 = por %p130, %p131
      %p133 = scmp.ne.s32.totalorder %s124, %s125
      %p134 = scmp.eq.s32.totalorder %s25, 0
      %p135 = por %p133, %p134
      %p136 = scmp.ne.s32.totalorder %s124, %s125
      %p137 = scmp.eq.s32.totalorder %s26, 3
      %p138 = por %p136, %p137
      %p140 = scmp.ne.s32.totalorder %s125, %s139
      %p141 = scmp.eq.s32.totalorder %s26, 0
      %p142 = por %p140, %p141
      %s144 = sadd.s32 %s143, 1
      %p147 = scmp.eq.s32.totalorder %s20, 3
      %p148 = scmp.ne.s32.totalorder %s143, %s145
      %p149 = scmp.eq.s32.totalorder %s20, 0
      %p150 = por %p148, %p149
      %p151 = scmp.ne.s32.totalorder %s143, %s145
      %p152 = scmp.eq.s32.totalorder %s25, 3
      %p153 = por %p151, %p152
      %p154 = scmp.ne.s32.totalorder %s145, %s146
      %p155 = scmp.eq.s32.totalorder %s25, 0
      %p156 = por %p154, %p155
      %p157 = scmp.ne.s32.totalorder %s145, %s146
      %p158 = scmp.eq.s32.totalorder %s26, 3
      %p159 = por %p157, %p158
      %p161 = scmp.ne.s32.totalorder %s146, %s160
      %p162 = scmp.eq.s32.totalorder %s26, 0
      %p163 = por %p161, %p162
      %s165 = sadd.s32 %s164, 1
      %p168 = scmp.eq.s32.totalorder %s20, 3
      %p169 = scmp.ne.s32.totalorder %s164, %s166
      %p170 = scmp.eq.s32.totalorder %s20, 0
      %p171 = por %p169, %p170
      %p172 = scmp.ne.s32.totalorder %s164, %s166
      %p173 = scmp.eq.s32.totalorder %s25, 3
      %p174 = por %p172, %p173
      %p175 = scmp.ne.s32.totalorder %s166, %s167
      %p176 = scmp.eq.s32.totalorder %s25, 0
      %p177 = por %p175, %p176
      %p178 = scmp.ne.s32.totalorder %s166, %s167
      %p179 = scmp.eq.s32.totalorder %s26, 3
      %p180 = por %p178, %p179
      %p182 = scmp.ne.s32.totalorder %s167, %s181
      %p183 = scmp.eq.s32.totalorder %s26, 0
      %p184 = por %p182, %p183
      %s186 = sadd.s32 %s185, 1
      %p189 = scmp.eq.s32.totalorder %s20, 3
      %p190 = scmp.ne.s32.totalorder %s185, %s187
      %p191 = scmp.eq.s32.totalorder %s20, 0
      %p192 = por %p190, %p191
      %p193 = scmp.ne.s32.totalorder %s185, %s187
      %p194 = scmp.eq.s32.totalorder %s25, 3
      %p195 = por %p193, %p194
      %p196 = scmp.ne.s32.totalorder %s187, %s188
      %p197 = scmp.eq.s32.totalorder %s25, 0
      %p198 = por %p196, %p197
      %p199 = scmp.ne.s32.totalorder %s187, %s188
      %p200 = scmp.eq.s32.totalorder %s26, 3
      %p201 = por %p199, %p200
      %p203 = scmp.ne.s32.totalorder %s188, %s202
      %p204 = scmp.eq.s32.totalorder %s26, 0
      %p205 = por %p203, %p204
      %p206 = scmp.le.s32.totalorder 1, %s20
      %p207 = scmp.lt.s32.totalorder %s20, 5
      %p208 = pnand %p206, %p207
      %p209 = pneg %p208
      // Predicated region
      $region9: #{tpu_custom_call.1} parent=5 // pred_check
        _
      $region10: #{tpu_custom_call.1} parent=5 // pred_check_branch
        %211 = sbr.rel (%p208) target = $region12
      $region11: #{tpu_custom_call.1} parent=5 // pred_region
        %s212 = ssub.s32 %s20, 1
        // Predicated region
        $region13: #{tpu_custom_call.1} parent=11 // pred_check
          %p213 = pneg %p67
        $region14: #{tpu_custom_call.1} parent=11 // pred_check_branch
          %215 = sbr.rel (%p213) target = $region16
        $region15: #{tpu_custom_call.1} parent=11 // pred_region
          %s217 = ssub.s32 512, 512
          %218 = vsyncadd [#allocation7], %s217
          %s219 = sshll.u32 [#allocation6], 4
          %s220 = int_to_ptr.vmem [resolvable:$true] %s219
          %225 = dma.hbm_to_vmem [thread:$0]  %s1, 512, %s220, [#allocation7], 256, 256, 16
        $region16: #{tpu_custom_call.1} parent=11 // pred_fallthru
          _
        // Predicated region
        $region17: #{tpu_custom_call.1} parent=11 // pred_check
          %p226 = pneg %p114
        $region18: #{tpu_custom_call.1} parent=11 // pred_check_branch
          %228 = sbr.rel (%p226) target = $region20
        $region19: #{tpu_custom_call.1} parent=11 // pred_region
          %s230 = ssub.s32 8192, 8192
          %231 = vsyncadd [#allocation7], %s230
          %s232 = sshll.u32 [#allocation9], 4
          %s233 = int_to_ptr.vmem [resolvable:$true] %s232
          %238 = dma.hbm_to_vmem [thread:$0]  %s3, 8192, %s233, [#allocation7], 256, 256, 16
        $region20: #{tpu_custom_call.1} parent=11 // pred_fallthru
          _
        // Predicated region
        $region21: #{tpu_custom_call.1} parent=11 // pred_check
          %p239 = pneg %p135
        $region22: #{tpu_custom_call.1} parent=11 // pred_check_branch
          %241 = sbr.rel (%p239) target = $region24
        $region23: #{tpu_custom_call.1} parent=11 // pred_region
          %s243 = ssub.s32 64, 64
          %244 = vsyncadd [#allocation11], %s243
          %s246 = sshll.u32 [#allocation10], 4
          %s247 = int_to_ptr.vmem [resolvable:$true] %s246
          %249 = dma.hbm_to_vmem [thread:$0]  %s4, 64, %s247, [#allocation11]
        $region24: #{tpu_custom_call.1} parent=11 // pred_fallthru
          _
        // Predicated region
        $region25: #{tpu_custom_call.1} parent=11 // pred_check
          %p250 = pneg %p156
        $region26: #{tpu_custom_call.1} parent=11 // pred_check_branch
          %252 = sbr.rel (%p250) target = $region28
        $region27: #{tpu_custom_call.1} parent=11 // pred_region
          %s254 = ssub.s32 4096, 4096
          %255 = vsyncadd [#allocation11], %s254
          %s256 = sshll.u32 [#allocation12], 4
          %s257 = int_to_ptr.vmem [resolvable:$true] %s256
          %262 = dma.hbm_to_vmem [thread:$0]  %s5, 4096, %s257, [#allocation11], 64, 64, 4
        $region28: #{tpu_custom_call.1} parent=11 // pred_fallthru
          _
        // Predicated region
        $region29: #{tpu_custom_call.1} parent=11 // pred_check
          %p263 = pneg %p177
        $region30: #{tpu_custom_call.1} parent=11 // pred_check_branch
          %265 = sbr.rel (%p263) target = $region32
        $region31: #{tpu_custom_call.1} parent=11 // pred_region
          %s267 = ssub.s32 16, 16
          %268 = vsyncadd [#allocation14], %s267
          %s270 = sshll.u32 [#allocation13], 4
          %s271 = int_to_ptr.vmem [resolvable:$true] %s270
          %273 = dma.hbm_to_vmem [thread:$0]  %s6, 16, %s271, [#allocation14]
        $region32: #{tpu_custom_call.1} parent=11 // pred_fallthru
          _
      $region12: #{tpu_custom_call.1} parent=5 // pred_fallthru
        _
      %p274 = scmp.lt.s32.totalorder %s20, 4
      // Predicated region
      $region33: #{tpu_custom_call.1} parent=5 // pred_check
        %p275 = pneg %p274
      $region34: #{tpu_custom_call.1} parent=5 // pred_check_branch
        %277 = sbr.rel (%p275) target = $region36
      $region35: #{tpu_custom_call.1} parent=5 // pred_region
        // Predicated region
        $region37: #{tpu_custom_call.1} parent=35 // pred_check
          %p278 = pneg %p40
        $region38: #{tpu_custom_call.1} parent=35 // pred_check_branch
          %280 = sbr.rel (%p278) target = $region40
        $region39: #{tpu_custom_call.1} parent=35 // pred_region
          %s281 = sand.u32 %s20, 1
          %s282 = scalar_lea.sflag [#allocation4], %s281
          %s283 = sand.u32 %s30, 1
          %s284 = smul.addr %s283, 8
          %s285 = scalar_lea.vmem [#allocation3], %s284
          %s286 = smul.u32 4, %s20
          %s288 = ssub.s32 128, 128
          %289 = vsyncadd %s282, %s288
          %s290 = smul.addr %s286, 32
          %s291 = scalar_lea.hbm %s0, %s290
          %s293 = sshll.u32 %s285, 4
          %s294 = int_to_ptr.vmem [resolvable:$true] %s293
          %296 = dma.hbm_to_vmem [thread:$0]  %s291, 128, %s294, %s282
        $region40: #{tpu_custom_call.1} parent=35 // pred_fallthru
          _
        // Predicated region
        $region41: #{tpu_custom_call.1} parent=35 // pred_check
          %p297 = pneg %p87
        $region42: #{tpu_custom_call.1} parent=35 // pred_check_branch
          %299 = sbr.rel (%p297) target = $region44
        $region43: #{tpu_custom_call.1} parent=35 // pred_region
          %s300 = sand.u32 %s20, 1
          %s301 = scalar_lea.sflag [#allocation4], %s300
          %s302 = sand.u32 %s77, 1
          %s303 = smul.addr %s302, 1024
          %s304 = scalar_lea.vmem [#allocation8], %s303
          %s305 = smul.u32 64, %s20
          %s307 = ssub.s32 16384, 16384
          %308 = vsyncadd %s301, %s307
          %s309 = smul.addr %s305, 4
          %s310 = smul.addr %s309, 64
          %s311 = scalar_lea.hbm %s2, %s310
          %s312 = sshll.u32 %s304, 4
          %s313 = int_to_ptr.vmem [resolvable:$true] %s312
          %318 = dma.hbm_to_vmem [thread:$0]  %s311, 16384, %s313, %s301, 256, 256, 16
        $region44: #{tpu_custom_call.1} parent=35 // pred_fallthru
          _
      $region36: #{tpu_custom_call.1} parent=5 // pred_fallthru
        _
      %p319 = scmp.le.s32.totalorder 1, %s20
      %p320 = scmp.lt.s32.totalorder %s20, 5
      %p321 = pnand %p319, %p320
      %p322 = pneg %p321
      // Predicated region
      $region45: #{tpu_custom_call.1} parent=5 // pred_check
        _
      $region46: #{tpu_custom_call.1} parent=5 // pred_check_branch
        %324 = sbr.rel (%p321) target = $region48
      $region47: #{tpu_custom_call.1} parent=5 // pred_region
        %s325 = ssub.s32 %s20, 1
        %s326 = sand.u32 %s25, 1
        %s327 = scalar_lea.sflag [#allocation4], %s326
        %s328 = sand.u32 %s33, 1
        %s329 = smul.addr %s328, 8
        %s330 = scalar_lea.vmem [#allocation3], %s329
        // Predicated region
        $region49: #{tpu_custom_call.1} parent=47 // pred_check
          %p331 = pneg %p46
        $region50: #{tpu_custom_call.1} parent=47 // pred_check_branch
          %333 = sbr.rel (%p331) target = $region52
        $region51: #{tpu_custom_call.1} parent=47 // pred_region
          %334 = dma.done %s327, 128
        $region52: #{tpu_custom_call.1} parent=47 // pred_fallthru
          _
        // Predicated region
        $region53: #{tpu_custom_call.1} parent=47 // pred_check
          %p335 = pneg %p67
        $region54: #{tpu_custom_call.1} parent=47 // pred_check_branch
          %337 = sbr.rel (%p335) target = $region56
        $region55: #{tpu_custom_call.1} parent=47 // pred_region
          %338 = dma.done [#allocation7], 512
        $region56: #{tpu_custom_call.1} parent=47 // pred_fallthru
          _
        %s339 = sand.u32 %s25, 1
        %s340 = scalar_lea.sflag [#allocation4], %s339
        %s341 = sand.u32 %s80, 1
        %s342 = smul.addr %s341, 1024
        %s343 = scalar_lea.vmem [#allocation8], %s342
        // Predicated region
        $region57: #{tpu_custom_call.1} parent=47 // pred_check
          %p344 = pneg %p93
        $region58: #{tpu_custom_call.1} parent=47 // pred_check_branch
          %346 = sbr.rel (%p344) target = $region60
        $region59: #{tpu_custom_call.1} parent=47 // pred_region
          %347 = dma.done %s340, 16384
        $region60: #{tpu_custom_call.1} parent=47 // pred_fallthru
          _
        // Predicated region
        $region61: #{tpu_custom_call.1} parent=47 // pred_check
          %p348 = pneg %p114
        $region62: #{tpu_custom_call.1} parent=47 // pred_check_branch
          %350 = sbr.rel (%p348) target = $region64
        $region63: #{tpu_custom_call.1} parent=47 // pred_region
          %351 = dma.done [#allocation7], 8192
        $region64: #{tpu_custom_call.1} parent=47 // pred_fallthru
          _
        // Predicated region
        $region65: #{tpu_custom_call.1} parent=47 // pred_check
          %p352 = pneg %p135
        $region66: #{tpu_custom_call.1} parent=47 // pred_check_branch
          %354 = sbr.rel (%p352) target = $region68
        $region67: #{tpu_custom_call.1} parent=47 // pred_region
          %355 = dma.done [#allocation11], 64
        $region68: #{tpu_custom_call.1} parent=47 // pred_fallthru
          _
        // Predicated region
        $region69: #{tpu_custom_call.1} parent=47 // pred_check
          %p356 = pneg %p156
        $region70: #{tpu_custom_call.1} parent=47 // pred_check_branch
          %358 = sbr.rel (%p356) target = $region72
        $region71: #{tpu_custom_call.1} parent=47 // pred_region
          %359 = dma.done [#allocation11], 4096
        $region72: #{tpu_custom_call.1} parent=47 // pred_fallthru
          _
        // Predicated region
        $region73: #{tpu_custom_call.1} parent=47 // pred_check
          %p360 = pneg %p177
        $region74: #{tpu_custom_call.1} parent=47 // pred_check_branch
          %362 = sbr.rel (%p360) target = $region76
        $region75: #{tpu_custom_call.1} parent=47 // pred_region
          %363 = dma.done [#allocation14], 16
        $region76: #{tpu_custom_call.1} parent=47 // pred_fallthru
          _
        %s364 = sand.u32 %s25, 1
        %s365 = scalar_lea.sflag [#allocation4], %s364
        %s366 = sand.u32 %s33, 1
        %s367 = smul.addr %s366, 8
        %s368 = scalar_lea.vmem [#allocation3], %s367
        %p369 = pneg %p46
        %p370 = pneg %p43
        %p371 = pneg %p67
        %p372 = pneg %p64
        %s373 = sand.u32 %s25, 1
        %s374 = scalar_lea.sflag [#allocation4], %s373
        %s375 = sand.u32 %s80, 1
        %s376 = smul.addr %s375, 1024
        %s377 = scalar_lea.vmem [#allocation8], %s376
        %p378 = pneg %p93
        %p379 = pneg %p90
        %p380 = pneg %p114
        %p381 = pneg %p111
        %p382 = pneg %p135
        %p383 = pneg %p132
        %p384 = pneg %p156
        %p385 = pneg %p153
        %p386 = pneg %p177
        %p387 = pneg %p174
        %p388 = pneg %p198
        %p389 = pneg %p195
        %s390 = smul.u32 4, %s25
        %s391 = smul.u32 64, %s25
        %p393 = scmp.eq.s32.totalorder %s25, 0
        // Predicated region
        $region77: #{tpu_custom_call.1} parent=47 // pred_check
          %p394 = pneg %p393
        $region78: #{tpu_custom_call.1} parent=47 // pred_check_branch
          %396 = sbr.rel (%p394) target = $region80
        $region79: #{tpu_custom_call.1} parent=47 // pred_region
          %397 = vst [vmem:[#allocation2] sm:$0xff] 0.0
        $region80: #{tpu_custom_call.1} parent=47 // pred_fallthru
          _
        %v398 = vld [vmem:[#allocation2] sm:$0xff]
        %v399 = vld [vmem:[%s330] sm:$0xff]
        %v401 = vcombine.high %v399, %v399
        %v403 = vunpack.c.l.s4 1983009808
        %v404 = vunpack.c.0.s8 %v403
        %v405 = vlaneseq
        %v406 = vshrl.u32 %v405, 7
        %v407 = vsub.s32 %v404, %v406
        %v408 = vrot.slane %v399, %v407
        %v410 = vunpack.c.l.s4 1983009808
        %v411 = vunpack.c.0.s8 %v410
        %v412 = vlaneseq
        %v413 = vshrl.u32 %v412, 7
        %v414 = vsub.s32 %v411, %v413
        %v415 = vrot.slane %v401, %v414
        %v416 = vcombine.high %v408, %v408
        %v417 = vcombine.high %v415, %v415
        %v422 = vpack.c.bf16 %v408, %v408
        %v423 = vpack.c.bf16 %v416, %v416
        %v424 = vpack.c.bf16 %v415, %v415
        %v425 = vpack.c.bf16 %v417, %v417
        %v426 = vld [vmem:[%s343] sm:$0xff]
        %v427 = vld [vmem:[%s343 + $0x8] sm:$0xff]
        %v428 = vld [vmem:[%s343 + $0x10] sm:$0xff]
        %v429 = vld [vmem:[%s343 + $0x18] sm:$0xff]
        %v430 = vld [vmem:[%s343 + $0x20] sm:$0xff]
        %v431 = vld [vmem:[%s343 + $0x28] sm:$0xff]
        %v432 = vld [vmem:[%s343 + $0x30] sm:$0xff]
        %v433 = vld [vmem:[%s343 + $0x38] sm:$0xff]
        %v434 = vld [vmem:[%s343 + $0x40] sm:$0xff]
        %v435 = vld [vmem:[%s343 + $0x48] sm:$0xff]
        %v436 = vld [vmem:[%s343 + $0x50] sm:$0xff]
        %v437 = vld [vmem:[%s343 + $0x58] sm:$0xff]
        %v438 = vld [vmem:[%s343 + $0x60] sm:$0xff]
        %v439 = vld [vmem:[%s343 + $0x68] sm:$0xff]
        %v440 = vld [vmem:[%s343 + $0x70] sm:$0xff]
        %v441 = vld [vmem:[%s343 + $0x78] sm:$0xff]
        %v442 = vld [vmem:[%s343 + $0x80] sm:$0xff]
        %v443 = vld [vmem:[%s343 + $0x88] sm:$0xff]
        %v444 = vld [vmem:[%s343 + $0x90] sm:$0xff]
        %v445 = vld [vmem:[%s343 + $0x98] sm:$0xff]
        %v446 = vld [vmem:[%s343 + $0xa0] sm:$0xff]
        %v447 = vld [vmem:[%s343 + $0xa8] sm:$0xff]
        %v448 = vld [vmem:[%s343 + $0xb0] sm:$0xff]
        %v449 = vld [vmem:[%s343 + $0xb8] sm:$0xff]
        %v450 = vld [vmem:[%s343 + $0xc0] sm:$0xff]
        %v451 = vld [vmem:[%s343 + $0xc8] sm:$0xff]
        %v452 = vld [vmem:[%s343 + $0xd0] sm:$0xff]
        %v453 = vld [vmem:[%s343 + $0xd8] sm:$0xff]
        %v454 = vld [vmem:[%s343 + $0xe0] sm:$0xff]
        %v455 = vld [vmem:[%s343 + $0xe8] sm:$0xff]
        %v456 = vld [vmem:[%s343 + $0xf0] sm:$0xff]
        %v457 = vld [vmem:[%s343 + $0xf8] sm:$0xff]
        %v458 = vld [vmem:[%s343 + $0x100] sm:$0xff]
        %v459 = vld [vmem:[%s343 + $0x108] sm:$0xff]
        %v460 = vld [vmem:[%s343 + $0x110] sm:$0xff]
        %v461 = vld [vmem:[%s343 + $0x118] sm:$0xff]
        %v462 = vld [vmem:[%s343 + $0x120] sm:$0xff]
        %v463 = vld [vmem:[%s343 + $0x128] sm:$0xff]
        %v464 = vld [vmem:[%s343 + $0x130] sm:$0xff]
        %v465 = vld [vmem:[%s343 + $0x138] sm:$0xff]
        %v466 = vld [vmem:[%s343 + $0x140] sm:$0xff]
        %v467 = vld [vmem:[%s343 + $0x148] sm:$0xff]
        %v468 = vld [vmem:[%s343 + $0x150] sm:$0xff]
        %v469 = vld [vmem:[%s343 + $0x158] sm:$0xff]
        %v470 = vld [vmem:[%s343 + $0x160] sm:$0xff]
        %v471 = vld [vmem:[%s343 + $0x168] sm:$0xff]
        %v472 = vld [vmem:[%s343 + $0x170] sm:$0xff]
        %v473 = vld [vmem:[%s343 + $0x178] sm:$0xff]
        %v474 = vld [vmem:[%s343 + $0x180] sm:$0xff]
        %v475 = vld [vmem:[%s343 + $0x188] sm:$0xff]
        %v476 = vld [vmem:[%s343 + $0x190] sm:$0xff]
        %v477 = vld [vmem:[%s343 + $0x198] sm:$0xff]
        %v478 = vld [vmem:[%s343 + $0x1a0] sm:$0xff]
        %v479 = vld [vmem:[%s343 + $0x1a8] sm:$0xff]
        %v480 = vld [vmem:[%s343 + $0x1b0] sm:$0xff]
        %v481 = vld [vmem:[%s343 + $0x1b8] sm:$0xff]
        %v482 = vld [vmem:[%s343 + $0x1c0] sm:$0xff]
        %v483 = vld [vmem:[%s343 + $0x1c8] sm:$0xff]
        %v484 = vld [vmem:[%s343 + $0x1d0] sm:$0xff]
        %v485 = vld [vmem:[%s343 + $0x1d8] sm:$0xff]
        %v486 = vld [vmem:[%s343 + $0x1e0] sm:$0xff]
        %v487 = vld [vmem:[%s343 + $0x1e8] sm:$0xff]
        %v488 = vld [vmem:[%s343 + $0x1f0] sm:$0xff]
        %v489 = vld [vmem:[%s343 + $0x1f8] sm:$0xff]
        %v490 = vld [vmem:[%s343 + $0x200] sm:$0xff]
        %v491 = vld [vmem:[%s343 + $0x208] sm:$0xff]
        %v492 = vld [vmem:[%s343 + $0x210] sm:$0xff]
        %v493 = vld [vmem:[%s343 + $0x218] sm:$0xff]
        %v494 = vld [vmem:[%s343 + $0x220] sm:$0xff]
        %v495 = vld [vmem:[%s343 + $0x228] sm:$0xff]
        %v496 = vld [vmem:[%s343 + $0x230] sm:$0xff]
        %v497 = vld [vmem:[%s343 + $0x238] sm:$0xff]
        %v498 = vld [vmem:[%s343 + $0x240] sm:$0xff]
        %v499 = vld [vmem:[%s343 + $0x248] sm:$0xff]
        %v500 = vld [vmem:[%s343 + $0x250] sm:$0xff]
        %v501 = vld [vmem:[%s343 + $0x258] sm:$0xff]
        %v502 = vld [vmem:[%s343 + $0x260] sm:$0xff]
        %v503 = vld [vmem:[%s343 + $0x268] sm:$0xff]
        %v504 = vld [vmem:[%s343 + $0x270] sm:$0xff]
        %v505 = vld [vmem:[%s343 + $0x278] sm:$0xff]
        %v506 = vld [vmem:[%s343 + $0x280] sm:$0xff]
        %v507 = vld [vmem:[%s343 + $0x288] sm:$0xff]
        %v508 = vld [vmem:[%s343 + $0x290] sm:$0xff]
        %v509 = vld [vmem:[%s343 + $0x298] sm:$0xff]
        %v510 = vld [vmem:[%s343 + $0x2a0] sm:$0xff]
        %v511 = vld [vmem:[%s343 + $0x2a8] sm:$0xff]
        %v512 = vld [vmem:[%s343 + $0x2b0] sm:$0xff]
        %v513 = vld [vmem:[%s343 + $0x2b8] sm:$0xff]
        %v514 = vld [vmem:[%s343 + $0x2c0] sm:$0xff]
        %v515 = vld [vmem:[%s343 + $0x2c8] sm:$0xff]
        %v516 = vld [vmem:[%s343 + $0x2d0] sm:$0xff]
        %v517 = vld [vmem:[%s343 + $0x2d8] sm:$0xff]
        %v518 = vld [vmem:[%s343 + $0x2e0] sm:$0xff]
        %v519 = vld [vmem:[%s343 + $0x2e8] sm:$0xff]
        %v520 = vld [vmem:[%s343 + $0x2f0] sm:$0xff]
        %v521 = vld [vmem:[%s343 + $0x2f8] sm:$0xff]
        %v522 = vld [vmem:[%s343 + $0x300] sm:$0xff]
        %v523 = vld [vmem:[%s343 + $0x308] sm:$0xff]
        %v524 = vld [vmem:[%s343 + $0x310] sm:$0xff]
        %v525 = vld [vmem:[%s343 + $0x318] sm:$0xff]
        %v526 = vld [vmem:[%s343 + $0x320] sm:$0xff]
        %v527 = vld [vmem:[%s343 + $0x328] sm:$0xff]
        %v528 = vld [vmem:[%s343 + $0x330] sm:$0xff]
        %v529 = vld [vmem:[%s343 + $0x338] sm:$0xff]
        %v530 = vld [vmem:[%s343 + $0x340] sm:$0xff]
        %v531 = vld [vmem:[%s343 + $0x348] sm:$0xff]
        %v532 = vld [vmem:[%s343 + $0x350] sm:$0xff]
        %v533 = vld [vmem:[%s343 + $0x358] sm:$0xff]
        %v534 = vld [vmem:[%s343 + $0x360] sm:$0xff]
        %v535 = vld [vmem:[%s343 + $0x368] sm:$0xff]
        %v536 = vld [vmem:[%s343 + $0x370] sm:$0xff]
        %v537 = vld [vmem:[%s343 + $0x378] sm:$0xff]
        %v538 = vld [vmem:[%s343 + $0x380] sm:$0xff]
        %v539 = vld [vmem:[%s343 + $0x388] sm:$0xff]
        %v540 = vld [vmem:[%s343 + $0x390] sm:$0xff]
        %v541 = vld [vmem:[%s343 + $0x398] sm:$0xff]
        %v542 = vld [vmem:[%s343 + $0x3a0] sm:$0xff]
        %v543 = vld [vmem:[%s343 + $0x3a8] sm:$0xff]
        %v544 = vld [vmem:[%s343 + $0x3b0] sm:$0xff]
        %v545 = vld [vmem:[%s343 + $0x3b8] sm:$0xff]
        %v546 = vld [vmem:[%s343 + $0x3c0] sm:$0xff]
        %v547 = vld [vmem:[%s343 + $0x3c8] sm:$0xff]
        %v548 = vld [vmem:[%s343 + $0x3d0] sm:$0xff]
        %v549 = vld [vmem:[%s343 + $0x3d8] sm:$0xff]
        %v550 = vld [vmem:[%s343 + $0x3e0] sm:$0xff]
        %v551 = vld [vmem:[%s343 + $0x3e8] sm:$0xff]
        %v552 = vld [vmem:[%s343 + $0x3f0] sm:$0xff]
        %v553 = vld [vmem:[%s343 + $0x3f8] sm:$0xff]
        %v682 = vunpack.c.l.b16 %v426
        %v683 = vunpack.c.h.b16 %v426
        %v684 = vunpack.c.l.b16 %v427
        %v685 = vunpack.c.h.b16 %v427
        %v686 = vunpack.c.l.b16 %v428
        %v687 = vunpack.c.h.b16 %v428
        %v688 = vunpack.c.l.b16 %v429
        %v689 = vunpack.c.h.b16 %v429
        %v690 = vunpack.c.l.b16 %v430
        %v691 = vunpack.c.h.b16 %v430
        %v692 = vunpack.c.l.b16 %v431
        %v693 = vunpack.c.h.b16 %v431
        %v694 = vunpack.c.l.b16 %v432
        %v695 = vunpack.c.h.b16 %v432
        %v696 = vunpack.c.l.b16 %v433
        %v697 = vunpack.c.h.b16 %v433
        %v698 = vunpack.c.l.b16 %v434
        %v699 = vunpack.c.h.b16 %v434
        %v700 = vunpack.c.l.b16 %v435
        %v701 = vunpack.c.h.b16 %v435
        %v702 = vunpack.c.l.b16 %v436
        %v703 = vunpack.c.h.b16 %v436
        %v704 = vunpack.c.l.b16 %v437
        %v705 = vunpack.c.h.b16 %v437
        %v706 = vunpack.c.l.b16 %v438
        %v707 = vunpack.c.h.b16 %v438
        %v708 = vunpack.c.l.b16 %v439
        %v709 = vunpack.c.h.b16 %v439
        %v710 = vunpack.c.l.b16 %v440
        %v711 = vunpack.c.h.b16 %v440
        %v712 = vunpack.c.l.b16 %v441
        %v713 = vunpack.c.h.b16 %v441
        %v714 = vunpack.c.l.b16 %v442
        %v715 = vunpack.c.h.b16 %v442
        %v716 = vunpack.c.l.b16 %v443
        %v717 = vunpack.c.h.b16 %v443
        %v718 = vunpack.c.l.b16 %v444
        %v719 = vunpack.c.h.b16 %v444
        %v720 = vunpack.c.l.b16 %v445
        %v721 = vunpack.c.h.b16 %v445
        %v722 = vunpack.c.l.b16 %v446
        %v723 = vunpack.c.h.b16 %v446
        %v724 = vunpack.c.l.b16 %v447
        %v725 = vunpack.c.h.b16 %v447
        %v726 = vunpack.c.l.b16 %v448
        %v727 = vunpack.c.h.b16 %v448
        %v728 = vunpack.c.l.b16 %v449
        %v729 = vunpack.c.h.b16 %v449
        %v730 = vunpack.c.l.b16 %v450
        %v731 = vunpack.c.h.b16 %v450
        %v732 = vunpack.c.l.b16 %v451
        %v733 = vunpack.c.h.b16 %v451
        %v734 = vunpack.c.l.b16 %v452
        %v735 = vunpack.c.h.b16 %v452
        %v736 = vunpack.c.l.b16 %v453
        %v737 = vunpack.c.h.b16 %v453
        %v738 = vunpack.c.l.b16 %v454
        %v739 = vunpack.c.h.b16 %v454
        %v740 = vunpack.c.l.b16 %v455
        %v741 = vunpack.c.h.b16 %v455
        %v742 = vunpack.c.l.b16 %v456
        %v743 = vunpack.c.h.b16 %v456
        %v744 = vunpack.c.l.b16 %v457
        %v745 = vunpack.c.h.b16 %v457
        %v746 = vunpack.c.l.b16 %v458
        %v747 = vunpack.c.h.b16 %v458
        %v748 = vunpack.c.l.b16 %v459
        %v749 = vunpack.c.h.b16 %v459
        %v750 = vunpack.c.l.b16 %v460
        %v751 = vunpack.c.h.b16 %v460
        %v752 = vunpack.c.l.b16 %v461
        %v753 = vunpack.c.h.b16 %v461
        %v754 = vunpack.c.l.b16 %v462
        %v755 = vunpack.c.h.b16 %v462
        %v756 = vunpack.c.l.b16 %v463
        %v757 = vunpack.c.h.b16 %v463
        %v758 = vunpack.c.l.b16 %v464
        %v759 = vunpack.c.h.b16 %v464
        %v760 = vunpack.c.l.b16 %v465
        %v761 = vunpack.c.h.b16 %v465
        %v762 = vunpack.c.l.b16 %v466
        %v763 = vunpack.c.h.b16 %v466
        %v764 = vunpack.c.l.b16 %v467
        %v765 = vunpack.c.h.b16 %v467
        %v766 = vunpack.c.l.b16 %v468
        %v767 = vunpack.c.h.b16 %v468
        %v768 = vunpack.c.l.b16 %v469
        %v769 = vunpack.c.h.b16 %v469
        %v770 = vunpack.c.l.b16 %v470
        %v771 = vunpack.c.h.b16 %v470
        %v772 = vunpack.c.l.b16 %v471
        %v773 = vunpack.c.h.b16 %v471
        %v774 = vunpack.c.l.b16 %v472
        %v775 = vunpack.c.h.b16 %v472
        %v776 = vunpack.c.l.b16 %v473
        %v777 = vunpack.c.h.b16 %v473
        %v778 = vunpack.c.l.b16 %v474
        %v779 = vunpack.c.h.b16 %v474
        %v780 = vunpack.c.l.b16 %v475
        %v781 = vunpack.c.h.b16 %v475
        %v782 = vunpack.c.l.b16 %v476
        %v783 = vunpack.c.h.b16 %v476
        %v784 = vunpack.c.l.b16 %v477
        %v785 = vunpack.c.h.b16 %v477
        %v786 = vunpack.c.l.b16 %v478
        %v787 = vunpack.c.h.b16 %v478
        %v788 = vunpack.c.l.b16 %v479
        %v789 = vunpack.c.h.b16 %v479
        %v790 = vunpack.c.l.b16 %v480
        %v791 = vunpack.c.h.b16 %v480
        %v792 = vunpack.c.l.b16 %v481
        %v793 = vunpack.c.h.b16 %v481
        %v794 = vunpack.c.l.b16 %v482
        %v795 = vunpack.c.h.b16 %v482
        %v796 = vunpack.c.l.b16 %v483
        %v797 = vunpack.c.h.b16 %v483
        %v798 = vunpack.c.l.b16 %v484
        %v799 = vunpack.c.h.b16 %v484
        %v800 = vunpack.c.l.b16 %v485
        %v801 = vunpack.c.h.b16 %v485
        %v802 = vunpack.c.l.b16 %v486
        %v803 = vunpack.c.h.b16 %v486
        %v804 = vunpack.c.l.b16 %v487
        %v805 = vunpack.c.h.b16 %v487
        %v806 = vunpack.c.l.b16 %v488
        %v807 = vunpack.c.h.b16 %v488
        %v808 = vunpack.c.l.b16 %v489
        %v809 = vunpack.c.h.b16 %v489
        %v810 = vunpack.c.l.b16 %v490
        %v811 = vunpack.c.h.b16 %v490
        %v812 = vunpack.c.l.b16 %v491
        %v813 = vunpack.c.h.b16 %v491
        %v814 = vunpack.c.l.b16 %v492
        %v815 = vunpack.c.h.b16 %v492
        %v816 = vunpack.c.l.b16 %v493
        %v817 = vunpack.c.h.b16 %v493
        %v818 = vunpack.c.l.b16 %v494
        %v819 = vunpack.c.h.b16 %v494
        %v820 = vunpack.c.l.b16 %v495
        %v821 = vunpack.c.h.b16 %v495
        %v822 = vunpack.c.l.b16 %v496
        %v823 = vunpack.c.h.b16 %v496
        %v824 = vunpack.c.l.b16 %v497
        %v825 = vunpack.c.h.b16 %v497
        %v826 = vunpack.c.l.b16 %v498
        %v827 = vunpack.c.h.b16 %v498
        %v828 = vunpack.c.l.b16 %v499
        %v829 = vunpack.c.h.b16 %v499
        %v830 = vunpack.c.l.b16 %v500
        %v831 = vunpack.c.h.b16 %v500
        %v832 = vunpack.c.l.b16 %v501
        %v833 = vunpack.c.h.b16 %v501
        %v834 = vunpack.c.l.b16 %v502
        %v835 = vunpack.c.h.b16 %v502
        %v836 = vunpack.c.l.b16 %v503
        %v837 = vunpack.c.h.b16 %v503
        %v838 = vunpack.c.l.b16 %v504
        %v839 = vunpack.c.h.b16 %v504
        %v840 = vunpack.c.l.b16 %v505
        %v841 = vunpack.c.h.b16 %v505
        %v842 = vunpack.c.l.b16 %v506
        %v843 = vunpack.c.h.b16 %v506
        %v844 = vunpack.c.l.b16 %v507
        %v845 = vunpack.c.h.b16 %v507
        %v846 = vunpack.c.l.b16 %v508
        %v847 = vunpack.c.h.b16 %v508
        %v848 = vunpack.c.l.b16 %v509
        %v849 = vunpack.c.h.b16 %v509
        %v850 = vunpack.c.l.b16 %v510
        %v851 = vunpack.c.h.b16 %v510
        %v852 = vunpack.c.l.b16 %v511
        %v853 = vunpack.c.h.b16 %v511
        %v854 = vunpack.c.l.b16 %v512
        %v855 = vunpack.c.h.b16 %v512
        %v856 = vunpack.c.l.b16 %v513
        %v857 = vunpack.c.h.b16 %v513
        %v858 = vunpack.c.l.b16 %v514
        %v859 = vunpack.c.h.b16 %v514
        %v860 = vunpack.c.l.b16 %v515
        %v861 = vunpack.c.h.b16 %v515
        %v862 = vunpack.c.l.b16 %v516
        %v863 = vunpack.c.h.b16 %v516
        %v864 = vunpack.c.l.b16 %v517
        %v865 = vunpack.c.h.b16 %v517
        %v866 = vunpack.c.l.b16 %v518
        %v867 = vunpack.c.h.b16 %v518
        %v868 = vunpack.c.l.b16 %v519
        %v869 = vunpack.c.h.b16 %v519
        %v870 = vunpack.c.l.b16 %v520
        %v871 = vunpack.c.h.b16 %v520
        %v872 = vunpack.c.l.b16 %v521
        %v873 = vunpack.c.h.b16 %v521
        %v874 = vunpack.c.l.b16 %v522
        %v875 = vunpack.c.h.b16 %v522
        %v876 = vunpack.c.l.b16 %v523
        %v877 = vunpack.c.h.b16 %v523
        %v878 = vunpack.c.l.b16 %v524
        %v879 = vunpack.c.h.b16 %v524
        %v880 = vunpack.c.l.b16 %v525
        %v881 = vunpack.c.h.b16 %v525
        %v882 = vunpack.c.l.b16 %v526
        %v883 = vunpack.c.h.b16 %v526
        %v884 = vunpack.c.l.b16 %v527
        %v885 = vunpack.c.h.b16 %v527
        %v886 = vunpack.c.l.b16 %v528
        %v887 = vunpack.c.h.b16 %v528
        %v888 = vunpack.c.l.b16 %v529
        %v889 = vunpack.c.h.b16 %v529
        %v890 = vunpack.c.l.b16 %v530
        %v891 = vunpack.c.h.b16 %v530
        %v892 = vunpack.c.l.b16 %v531
        %v893 = vunpack.c.h.b16 %v531
        %v894 = vunpack.c.l.b16 %v532
        %v895 = vunpack.c.h.b16 %v532
        %v896 = vunpack.c.l.b16 %v533
        %v897 = vunpack.c.h.b16 %v533
        %v898 = vunpack.c.l.b16 %v534
        %v899 = vunpack.c.h.b16 %v534
        %v900 = vunpack.c.l.b16 %v535
        %v901 = vunpack.c.h.b16 %v535
        %v902 = vunpack.c.l.b16 %v536
        %v903 = vunpack.c.h.b16 %v536
        %v904 = vunpack.c.l.b16 %v537
        %v905 = vunpack.c.h.b16 %v537
        %v906 = vunpack.c.l.b16 %v538
        %v907 = vunpack.c.h.b16 %v538
        %v908 = vunpack.c.l.b16 %v539
        %v909 = vunpack.c.h.b16 %v539
        %v910 = vunpack.c.l.b16 %v540
        %v911 = vunpack.c.h.b16 %v540
        %v912 = vunpack.c.l.b16 %v541
        %v913 = vunpack.c.h.b16 %v541
        %v914 = vunpack.c.l.b16 %v542
        %v915 = vunpack.c.h.b16 %v542
        %v916 = vunpack.c.l.b16 %v543
        %v917 = vunpack.c.h.b16 %v543
        %v918 = vunpack.c.l.b16 %v544
        %v919 = vunpack.c.h.b16 %v544
        %v920 = vunpack.c.l.b16 %v545
        %v921 = vunpack.c.h.b16 %v545
        %v922 = vunpack.c.l.b16 %v546
        %v923 = vunpack.c.h.b16 %v546
        %v924 = vunpack.c.l.b16 %v547
        %v925 = vunpack.c.h.b16 %v547
        %v926 = vunpack.c.l.b16 %v548
        %v927 = vunpack.c.h.b16 %v548
        %v928 = vunpack.c.l.b16 %v549
        %v929 = vunpack.c.h.b16 %v549
        %v930 = vunpack.c.l.b16 %v550
        %v931 = vunpack.c.h.b16 %v550
        %v932 = vunpack.c.l.b16 %v551
        %v933 = vunpack.c.h.b16 %v551
        %v934 = vunpack.c.l.b16 %v552
        %v935 = vunpack.c.h.b16 %v552
        %v936 = vunpack.c.l.b16 %v553
        %v937 = vunpack.c.h.b16 %v553
        %v938 = vpack.c.b16 %v686, %v682
        %v939 = vpack.c.b16 %v687, %v683
        %v940 = vpack.c.b16 %v688, %v684
        %v941 = vpack.c.b16 %v689, %v685
        %v942 = vpack.c.b16 %v694, %v690
        %v943 = vpack.c.b16 %v695, %v691
        %v944 = vpack.c.b16 %v696, %v692
        %v945 = vpack.c.b16 %v697, %v693
        %v946 = vpack.c.b16 %v702, %v698
        %v947 = vpack.c.b16 %v703, %v699
        %v948 = vpack.c.b16 %v704, %v700
        %v949 = vpack.c.b16 %v705, %v701
        %v950 = vpack.c.b16 %v710, %v706
        %v951 = vpack.c.b16 %v711, %v707
        %v952 = vpack.c.b16 %v712, %v708
        %v953 = vpack.c.b16 %v713, %v709
        %v954 = vpack.c.b16 %v718, %v714
        %v955 = vpack.c.b16 %v719, %v715
        %v956 = vpack.c.b16 %v720, %v716
        %v957 = vpack.c.b16 %v721, %v717
        %v958 = vpack.c.b16 %v726, %v722
        %v959 = vpack.c.b16 %v727, %v723
        %v960 = vpack.c.b16 %v728, %v724
        %v961 = vpack.c.b16 %v729, %v725
        %v962 = vpack.c.b16 %v734, %v730
        %v963 = vpack.c.b16 %v735, %v731
        %v964 = vpack.c.b16 %v736, %v732
        %v965 = vpack.c.b16 %v737, %v733
        %v966 = vpack.c.b16 %v742, %v738
        %v967 = vpack.c.b16 %v743, %v739
        %v968 = vpack.c.b16 %v744, %v740
        %v969 = vpack.c.b16 %v745, %v741
        %v970 = vpack.c.b16 %v750, %v746
        %v971 = vpack.c.b16 %v751, %v747
        %v972 = vpack.c.b16 %v752, %v748
        %v973 = vpack.c.b16 %v753, %v749
        %v974 = vpack.c.b16 %v758, %v754
        %v975 = vpack.c.b16 %v759, %v755
        %v976 = vpack.c.b16 %v760, %v756
        %v977 = vpack.c.b16 %v761, %v757
        %v978 = vpack.c.b16 %v766, %v762
        %v979 = vpack.c.b16 %v767, %v763
        %v980 = vpack.c.b16 %v768, %v764
        %v981 = vpack.c.b16 %v769, %v765
        %v982 = vpack.c.b16 %v774, %v770
        %v983 = vpack.c.b16 %v775, %v771
        %v984 = vpack.c.b16 %v776, %v772
        %v985 = vpack.c.b16 %v777, %v773
        %v986 = vpack.c.b16 %v782, %v778
        %v987 = vpack.c.b16 %v783, %v779
        %v988 = vpack.c.b16 %v784, %v780
        %v989 = vpack.c.b16 %v785, %v781
        %v990 = vpack.c.b16 %v790, %v786
        %v991 = vpack.c.b16 %v791, %v787
        %v992 = vpack.c.b16 %v792, %v788
        %v993 = vpack.c.b16 %v793, %v789
        %v994 = vpack.c.b16 %v798, %v794
        %v995 = vpack.c.b16 %v799, %v795
        %v996 = vpack.c.b16 %v800, %v796
        %v997 = vpack.c.b16 %v801, %v797
        %v998 = vpack.c.b16 %v806, %v802
        %v999 = vpack.c.b16 %v807, %v803
        %v1000 = vpack.c.b16 %v808, %v804
        %v1001 = vpack.c.b16 %v809, %v805
        %v1002 = vpack.c.b16 %v814, %v810
        %v1003 = vpack.c.b16 %v815, %v811
        %v1004 = vpack.c.b16 %v816, %v812
        %v1005 = vpack.c.b16 %v817, %v813
        %v1006 = vpack.c.b16 %v822, %v818
        %v1007 = vpack.c.b16 %v823, %v819
        %v1008 = vpack.c.b16 %v824, %v820
        %v1009 = vpack.c.b16 %v825, %v821
        %v1010 = vpack.c.b16 %v830, %v826
        %v1011 = vpack.c.b16 %v831, %v827
        %v1012 = vpack.c.b16 %v832, %v828
        %v1013 = vpack.c.b16 %v833, %v829
        %v1014 = vpack.c.b16 %v838, %v834
        %v1015 = vpack.c.b16 %v839, %v835
        %v1016 = vpack.c.b16 %v840, %v836
        %v1017 = vpack.c.b16 %v841, %v837
        %v1018 = vpack.c.b16 %v846, %v842
        %v1019 = vpack.c.b16 %v847, %v843
        %v1020 = vpack.c.b16 %v848, %v844
        %v1021 = vpack.c.b16 %v849, %v845
        %v1022 = vpack.c.b16 %v854, %v850
        %v1023 = vpack.c.b16 %v855, %v851
        %v1024 = vpack.c.b16 %v856, %v852
        %v1025 = vpack.c.b16 %v857, %v853
        %v1026 = vpack.c.b16 %v862, %v858
        %v1027 = vpack.c.b16 %v863, %v859
        %v1028 = vpack.c.b16 %v864, %v860
        %v1029 = vpack.c.b16 %v865, %v861
        %v1030 = vpack.c.b16 %v870, %v866
        %v1031 = vpack.c.b16 %v871, %v867
        %v1032 = vpack.c.b16 %v872, %v868
        %v1033 = vpack.c.b16 %v873, %v869
        %v1034 = vpack.c.b16 %v878, %v874
        %v1035 = vpack.c.b16 %v879, %v875
        %v1036 = vpack.c.b16 %v880, %v876
        %v1037 = vpack.c.b16 %v881, %v877
        %v1038 = vpack.c.b16 %v886, %v882
        %v1039 = vpack.c.b16 %v887, %v883
        %v1040 = vpack.c.b16 %v888, %v884
        %v1041 = vpack.c.b16 %v889, %v885
        %v1042 = vpack.c.b16 %v894, %v890
        %v1043 = vpack.c.b16 %v895, %v891
        %v1044 = vpack.c.b16 %v896, %v892
        %v1045 = vpack.c.b16 %v897, %v893
        %v1046 = vpack.c.b16 %v902, %v898
        %v1047 = vpack.c.b16 %v903, %v899
        %v1048 = vpack.c.b16 %v904, %v900
        %v1049 = vpack.c.b16 %v905, %v901
        %v1050 = vpack.c.b16 %v910, %v906
        %v1051 = vpack.c.b16 %v911, %v907
        %v1052 = vpack.c.b16 %v912, %v908
        %v1053 = vpack.c.b16 %v913, %v909
        %v1054 = vpack.c.b16 %v918, %v914
        %v1055 = vpack.c.b16 %v919, %v915
        %v1056 = vpack.c.b16 %v920, %v916
        %v1057 = vpack.c.b16 %v921, %v917
        %v1058 = vpack.c.b16 %v926, %v922
        %v1059 = vpack.c.b16 %v927, %v923
        %v1060 = vpack.c.b16 %v928, %v924
        %v1061 = vpack.c.b16 %v929, %v925
        %v1062 = vpack.c.b16 %v934, %v930
        %v1063 = vpack.c.b16 %v935, %v931
        %v1064 = vpack.c.b16 %v936, %v932
        %v1065 = vpack.c.b16 %v937, %v933
        %1194 = vmatprep.subr.bf16.mxu0 %v967
        %1195 = vmatpush1.bf16.msra.mxu0 %v966
        %1196 = vmatprep.subr.bf16.mxu0 %v963
        %1197 = vmatpush1.bf16.msra.mxu0 %v962
        %1198 = vmatprep.subr.bf16.mxu0 %v959
        %1199 = vmatpush1.bf16.msra.mxu0 %v958
        %1200 = vmatprep.subr.bf16.mxu0 %v955
        %1201 = vmatpush1.bf16.msra.mxu0 %v954
        %1202 = vmatprep.subr.bf16.mxu0 %v951
        %1203 = vmatpush1.bf16.msra.mxu0 %v950
        %1204 = vmatprep.subr.bf16.mxu0 %v947
        %1205 = vmatpush1.bf16.msra.mxu0 %v946
        %1206 = vmatprep.subr.bf16.mxu0 %v943
        %1207 = vmatpush1.bf16.msra.mxu0 %v942
        %1208 = vmatprep.subr.bf16.mxu0 %v939
        %1209 = vmatpush1.bf16.msra.mxu0 %v938
        %1210 = vmatprep.subr.bf16.mxu0 %v999
        %1211 = vmatpush2.bf16.msra.mxu0 %v998
        %1212 = vmatprep.subr.bf16.mxu0 %v995
        %1213 = vmatpush2.bf16.msra.mxu0 %v994
        %1214 = vmatprep.subr.bf16.mxu0 %v991
        %1215 = vmatpush2.bf16.msra.mxu0 %v990
        %1216 = vmatprep.subr.bf16.mxu0 %v987
        %1217 = vmatpush2.bf16.msra.mxu0 %v986
        %1218 = vmatprep.subr.bf16.mxu0 %v983
        %1219 = vmatpush2.bf16.msra.mxu0 %v982
        %1220 = vmatprep.subr.bf16.mxu0 %v979
        %1221 = vmatpush2.bf16.msra.mxu0 %v978
        %1222 = vmatprep.subr.bf16.mxu0 %v975
        %1223 = vmatpush2.bf16.msra.mxu0 %v974
        %1224 = vmatprep.subr.bf16.mxu0 %v971
        %1225 = vmatpush2.bf16.msra.mxu0 %v970
        %1226 = vmatprep.mubr.bf16.mxu0 %v423
        %1227 = vmatmul.mubr.bf16.gmra.mxu0 %v422
        %v1228 = vpop.f32.mrf.mxu0
        %v1229 = vadd.f32 0.0, %v1228
        %v1230 = vpop.f32.mrf.mxu0
        %v1231 = vadd.f32 0.0, %v1230
        %v1232 = vpop.f32.mrf.mxu0
        %v1233 = vpop.f32.mrf.mxu0
        %1234 = vdwg.mxu0
        %1235 = vmatprep.subr.bf16.mxu0 %v1031
        %1236 = vmatpush1.bf16.msra.mxu0 %v1030
        %1237 = vmatprep.subr.bf16.mxu0 %v1027
        %1238 = vmatpush1.bf16.msra.mxu0 %v1026
        %1239 = vmatprep.subr.bf16.mxu0 %v1023
        %1240 = vmatpush1.bf16.msra.mxu0 %v1022
        %1241 = vmatprep.subr.bf16.mxu0 %v1019
        %1242 = vmatpush1.bf16.msra.mxu0 %v1018
        %1243 = vmatprep.subr.bf16.mxu0 %v1015
        %1244 = vmatpush1.bf16.msra.mxu0 %v1014
        %1245 = vmatprep.subr.bf16.mxu0 %v1011
        %1246 = vmatpush1.bf16.msra.mxu0 %v1010
        %1247 = vmatprep.subr.bf16.mxu0 %v1007
        %1248 = vmatpush1.bf16.msra.mxu0 %v1006
        %1249 = vmatprep.subr.bf16.mxu0 %v1003
        %1250 = vmatpush1.bf16.msra.mxu0 %v1002
        %1251 = vmatprep.subr.bf16.mxu0 %v1063
        %1252 = vmatpush2.bf16.msra.mxu0 %v1062
        %1253 = vmatprep.subr.bf16.mxu0 %v1059
        %1254 = vmatpush2.bf16.msra.mxu0 %v1058
        %1255 = vmatprep.subr.bf16.mxu0 %v1055
        %1256 = vmatpush2.bf16.msra.mxu0 %v1054
        %1257 = vmatprep.subr.bf16.mxu0 %v1051
        %1258 = vmatpush2.bf16.msra.mxu0 %v1050
        %1259 = vmatprep.subr.bf16.mxu0 %v1047
        %1260 = vmatpush2.bf16.msra.mxu0 %v1046
        %1261 = vmatprep.subr.bf16.mxu0 %v1043
        %1262 = vmatpush2.bf16.msra.mxu0 %v1042
        %1263 = vmatprep.subr.bf16.mxu0 %v1039
        %1264 = vmatpush2.bf16.msra.mxu0 %v1038
        %1265 = vmatprep.subr.bf16.mxu0 %v1035
        %1266 = vmatpush2.bf16.msra.mxu0 %v1034
        %1267 = vmatprep.mubr.bf16.mxu0 %v425
        %1268 = vmatmul.mubr.bf16.gmra.mxu0 %v424
        %v1269 = vpop.f32.mrf.mxu0
        %v1270 = vadd.f32 %v1229, %v1269
        %v1271 = vpop.f32.mrf.mxu0
        %v1272 = vadd.f32 %v1231, %v1271
        %v1273 = vpop.f32.mrf.mxu0
        %v1274 = vpop.f32.mrf.mxu0
        %1275 = vdwg.mxu0
        %1276 = vmatprep.subr.bf16.mxu0 %v969
        %1277 = vmatpush1.bf16.msra.mxu0 %v968
        %1278 = vmatprep.subr.bf16.mxu0 %v965
        %1279 = vmatpush1.bf16.msra.mxu0 %v964
        %1280 = vmatprep.subr.bf16.mxu0 %v961
        %1281 = vmatpush1.bf16.msra.mxu0 %v960
        %1282 = vmatprep.subr.bf16.mxu0 %v957
        %1283 = vmatpush1.bf16.msra.mxu0 %v956
        %1284 = vmatprep.subr.bf16.mxu0 %v953
        %1285 = vmatpush1.bf16.msra.mxu0 %v952
        %1286 = vmatprep.subr.bf16.mxu0 %v949
        %1287 = vmatpush1.bf16.msra.mxu0 %v948
        %1288 = vmatprep.subr.bf16.mxu0 %v945
        %1289 = vmatpush1.bf16.msra.mxu0 %v944
        %1290 = vmatprep.subr.bf16.mxu0 %v941
        %1291 = vmatpush1.bf16.msra.mxu0 %v940
        %1292 = vmatprep.subr.bf16.mxu0 %v1001
        %1293 = vmatpush2.bf16.msra.mxu0 %v1000
        %1294 = vmatprep.subr.bf16.mxu0 %v997
        %1295 = vmatpush2.bf16.msra.mxu0 %v996
        %1296 = vmatprep.subr.bf16.mxu0 %v993
        %1297 = vmatpush2.bf16.msra.mxu0 %v992
        %1298 = vmatprep.subr.bf16.mxu0 %v989
        %1299 = vmatpush2.bf16.msra.mxu0 %v988
        %1300 = vmatprep.subr.bf16.mxu0 %v985
        %1301 = vmatpush2.bf16.msra.mxu0 %v984
        %1302 = vmatprep.subr.bf16.mxu0 %v981
        %1303 = vmatpush2.bf16.msra.mxu0 %v980
        %1304 = vmatprep.subr.bf16.mxu0 %v977
        %1305 = vmatpush2.bf16.msra.mxu0 %v976
        %1306 = vmatprep.subr.bf16.mxu0 %v973
        %1307 = vmatpush2.bf16.msra.mxu0 %v972
        %1308 = vmatprep.mubr.bf16.mxu0 %v423
        %1309 = vmatmul.mubr.bf16.gmra.mxu0 %v422
        %v1310 = vpop.f32.mrf.mxu0
        %v1311 = vadd.f32 0.0, %v1310
        %v1312 = vpop.f32.mrf.mxu0
        %v1313 = vadd.f32 0.0, %v1312
        %v1314 = vpop.f32.mrf.mxu0
        %v1315 = vpop.f32.mrf.mxu0
        %1316 = vdwg.mxu0
        %1317 = vmatprep.subr.bf16.mxu0 %v1033
        %1318 = vmatpush1.bf16.msra.mxu0 %v1032
        %1319 = vmatprep.subr.bf16.mxu0 %v1029
        %1320 = vmatpush1.bf16.msra.mxu0 %v1028
        %1321 = vmatprep.subr.bf16.mxu0 %v1025
        %1322 = vmatpush1.bf16.msra.mxu0 %v1024
        %1323 = vmatprep.subr.bf16.mxu0 %v1021
        %1324 = vmatpush1.bf16.msra.mxu0 %v1020
        %1325 = vmatprep.subr.bf16.mxu0 %v1017
        %1326 = vmatpush1.bf16.msra.mxu0 %v1016
        %1327 = vmatprep.subr.bf16.mxu0 %v1013
        %1328 = vmatpush1.bf16.msra.mxu0 %v1012
        %1329 = vmatprep.subr.bf16.mxu0 %v1009
        %1330 = vmatpush1.bf16.msra.mxu0 %v1008
        %1331 = vmatprep.subr.bf16.mxu0 %v1005
        %1332 = vmatpush1.bf16.msra.mxu0 %v1004
        %1333 = vmatprep.subr.bf16.mxu0 %v1065
        %1334 = vmatpush2.bf16.msra.mxu0 %v1064
        %1335 = vmatprep.subr.bf16.mxu0 %v1061
        %1336 = vmatpush2.bf16.msra.mxu0 %v1060
        %1337 = vmatprep.subr.bf16.mxu0 %v1057
        %1338 = vmatpush2.bf16.msra.mxu0 %v1056
        %1339 = vmatprep.subr.bf16.mxu0 %v1053
        %1340 = vmatpush2.bf16.msra.mxu0 %v1052
        %1341 = vmatprep.subr.bf16.mxu0 %v1049
        %1342 = vmatpush2.bf16.msra.mxu0 %v1048
        %1343 = vmatprep.subr.bf16.mxu0 %v1045
        %1344 = vmatpush2.bf16.msra.mxu0 %v1044
        %1345 = vmatprep.subr.bf16.mxu0 %v1041
        %1346 = vmatpush2.bf16.msra.mxu0 %v1040
        %1347 = vmatprep.subr.bf16.mxu0 %v1037
        %1348 = vmatpush2.bf16.msra.mxu0 %v1036
        %1349 = vmatprep.mubr.bf16.mxu0 %v425
        %1350 = vmatmul.mubr.bf16.gmra.mxu0 %v424
        %v1351 = vpop.f32.mrf.mxu0
        %v1352 = vadd.f32 %v1311, %v1351
        %v1353 = vpop.f32.mrf.mxu0
        %v1354 = vadd.f32 %v1313, %v1353
        %v1355 = vpop.f32.mrf.mxu0
        %v1356 = vpop.f32.mrf.mxu0
        %1357 = vdwg.mxu0
        %v1362 = vcombine.low %v1270, %v1272
        %v1363 = vcombine.low %v1352, %v1354
        %v1365 = vunpack.c.l.s4 1983009808
        %v1366 = vunpack.c.0.s8 %v1365
        %v1367 = vlaneseq
        %v1368 = vshrl.u32 %v1367, 7
        %v1369 = vsub.s32 %v1366, %v1368
        %v1370 = vrot.slane %v1362, %v1369
        %v1372 = vunpack.c.l.s4 1983009808
        %v1373 = vunpack.c.0.s8 %v1372
        %v1374 = vlaneseq
        %v1375 = vshrl.u32 %v1374, 7
        %v1376 = vsub.s32 %v1373, %v1375
        %v1377 = vrot.slane %v1363, %v1376
        %v1378 = vcombine.low %v1370, %v1377
        %v1380 = vadd.f32 %v398, %v1378
        %1381 = vst [vmem:[#allocation2] sm:$0xff] %v1380
        %p1382 = scmp.eq.s32.totalorder %s25, 3
        // Predicated region
        $region81: #{tpu_custom_call.1} parent=47 // pred_check
          %p1383 = pneg %p1382
        $region82: #{tpu_custom_call.1} parent=47 // pred_check_branch
          %1385 = sbr.rel (%p1383) target = $region84
        $region83: #{tpu_custom_call.1} parent=47 // pred_region
          %v1386 = vld [vmem:[#allocation6] sm:$0xff]
          %v1387 = vld [vmem:[#allocation6 + $0x8] sm:$0xff]
          %v1388 = vld [vmem:[#allocation6 + $0x10] sm:$0xff]
          %v1389 = vld [vmem:[#allocation6 + $0x18] sm:$0xff]
          %v1390 = vrot.slane %v1386, 4
          %v1391 = vadd.f32 %v1386, %v1390
          %v1392 = vrot.slane %v1391, 2
          %v1393 = vadd.f32 %v1391, %v1392
          %v1394 = vrot.slane %v1393, 1
          %v1395 = vadd.f32 %v1393, %v1394
          %v1396 = vrot.slane %v1387, 4
          %v1397 = vadd.f32 %v1387, %v1396
          %v1398 = vrot.slane %v1397, 2
          %v1399 = vadd.f32 %v1397, %v1398
          %v1400 = vrot.slane %v1399, 1
          %v1401 = vadd.f32 %v1399, %v1400
          %v1402 = vrot.slane %v1388, 4
          %v1403 = vadd.f32 %v1388, %v1402
          %v1404 = vrot.slane %v1403, 2
          %v1405 = vadd.f32 %v1403, %v1404
          %v1406 = vrot.slane %v1405, 1
          %v1407 = vadd.f32 %v1405, %v1406
          %v1408 = vrot.slane %v1389, 4
          %v1409 = vadd.f32 %v1389, %v1408
          %v1410 = vrot.slane %v1409, 2
          %v1411 = vadd.f32 %v1409, %v1410
          %v1412 = vrot.slane %v1411, 1
          %v1413 = vadd.f32 %v1411, %v1412
          %v1414 = vpack.c.bf16 %v1395, %v1395
          %v1415 = vpack.c.bf16 %v1401, %v1401
          %v1416 = vpack.c.bf16 %v1407, %v1407
          %v1417 = vpack.c.bf16 %v1413, %v1413
          %v1418 = vld [vmem:[#allocation2] sm:$0xff]
          %v1419 = vld [vmem:[#allocation9] sm:$0xff]
          %v1420 = vld [vmem:[#allocation9 + $0x8] sm:$0xff]
          %v1421 = vld [vmem:[#allocation9 + $0x10] sm:$0xff]
          %v1422 = vld [vmem:[#allocation9 + $0x18] sm:$0xff]
          %v1423 = vld [vmem:[#allocation9 + $0x20] sm:$0xff]
          %v1424 = vld [vmem:[#allocation9 + $0x28] sm:$0xff]
          %v1425 = vld [vmem:[#allocation9 + $0x30] sm:$0xff]
          %v1426 = vld [vmem:[#allocation9 + $0x38] sm:$0xff]
          %v1427 = vld [vmem:[#allocation9 + $0x40] sm:$0xff]
          %v1428 = vld [vmem:[#allocation9 + $0x48] sm:$0xff]
          %v1429 = vld [vmem:[#allocation9 + $0x50] sm:$0xff]
          %v1430 = vld [vmem:[#allocation9 + $0x58] sm:$0xff]
          %v1431 = vld [vmem:[#allocation9 + $0x60] sm:$0xff]
          %v1432 = vld [vmem:[#allocation9 + $0x68] sm:$0xff]
          %v1433 = vld [vmem:[#allocation9 + $0x70] sm:$0xff]
          %v1434 = vld [vmem:[#allocation9 + $0x78] sm:$0xff]
          %v1435 = vld [vmem:[#allocation9 + $0x80] sm:$0xff]
          %v1436 = vld [vmem:[#allocation9 + $0x88] sm:$0xff]
          %v1437 = vld [vmem:[#allocation9 + $0x90] sm:$0xff]
          %v1438 = vld [vmem:[#allocation9 + $0x98] sm:$0xff]
          %v1439 = vld [vmem:[#allocation9 + $0xa0] sm:$0xff]
          %v1440 = vld [vmem:[#allocation9 + $0xa8] sm:$0xff]
          %v1441 = vld [vmem:[#allocation9 + $0xb0] sm:$0xff]
          %v1442 = vld [vmem:[#allocation9 + $0xb8] sm:$0xff]
          %v1443 = vld [vmem:[#allocation9 + $0xc0] sm:$0xff]
          %v1444 = vld [vmem:[#allocation9 + $0xc8] sm:$0xff]
          %v1445 = vld [vmem:[#allocation9 + $0xd0] sm:$0xff]
          %v1446 = vld [vmem:[#allocation9 + $0xd8] sm:$0xff]
          %v1447 = vld [vmem:[#allocation9 + $0xe0] sm:$0xff]
          %v1448 = vld [vmem:[#allocation9 + $0xe8] sm:$0xff]
          %v1449 = vld [vmem:[#allocation9 + $0xf0] sm:$0xff]
          %v1450 = vld [vmem:[#allocation9 + $0xf8] sm:$0xff]
          %v1451 = vld [vmem:[#allocation9 + $0x100] sm:$0xff]
          %v1452 = vld [vmem:[#allocation9 + $0x108] sm:$0xff]
          %v1453 = vld [vmem:[#allocation9 + $0x110] sm:$0xff]
          %v1454 = vld [vmem:[#allocation9 + $0x118] sm:$0xff]
          %v1455 = vld [vmem:[#allocation9 + $0x120] sm:$0xff]
          %v1456 = vld [vmem:[#allocation9 + $0x128] sm:$0xff]
          %v1457 = vld [vmem:[#allocation9 + $0x130] sm:$0xff]
          %v1458 = vld [vmem:[#allocation9 + $0x138] sm:$0xff]
          %v1459 = vld [vmem:[#allocation9 + $0x140] sm:$0xff]
          %v1460 = vld [vmem:[#allocation9 + $0x148] sm:$0xff]
          %v1461 = vld [vmem:[#allocation9 + $0x150] sm:$0xff]
          %v1462 = vld [vmem:[#allocation9 + $0x158] sm:$0xff]
          %v1463 = vld [vmem:[#allocation9 + $0x160] sm:$0xff]
          %v1464 = vld [vmem:[#allocation9 + $0x168] sm:$0xff]
          %v1465 = vld [vmem:[#allocation9 + $0x170] sm:$0xff]
          %v1466 = vld [vmem:[#allocation9 + $0x178] sm:$0xff]
          %v1467 = vld [vmem:[#allocation9 + $0x180] sm:$0xff]
          %v1468 = vld [vmem:[#allocation9 + $0x188] sm:$0xff]
          %v1469 = vld [vmem:[#allocation9 + $0x190] sm:$0xff]
          %v1470 = vld [vmem:[#allocation9 + $0x198] sm:$0xff]
          %v1471 = vld [vmem:[#allocation9 + $0x1a0] sm:$0xff]
          %v1472 = vld [vmem:[#allocation9 + $0x1a8] sm:$0xff]
          %v1473 = vld [vmem:[#allocation9 + $0x1b0] sm:$0xff]
          %v1474 = vld [vmem:[#allocation9 + $0x1b8] sm:$0xff]
          %v1475 = vld [vmem:[#allocation9 + $0x1c0] sm:$0xff]
          %v1476 = vld [vmem:[#allocation9 + $0x1c8] sm:$0xff]
          %v1477 = vld [vmem:[#allocation9 + $0x1d0] sm:$0xff]
          %v1478 = vld [vmem:[#allocation9 + $0x1d8] sm:$0xff]
          %v1479 = vld [vmem:[#allocation9 + $0x1e0] sm:$0xff]
          %v1480 = vld [vmem:[#allocation9 + $0x1e8] sm:$0xff]
          %v1481 = vld [vmem:[#allocation9 + $0x1f0] sm:$0xff]
          %v1482 = vld [vmem:[#allocation9 + $0x1f8] sm:$0xff]
          %v1487 = vunpack.c.l.b16 %v1414
          %v1488 = vunpack.c.l.b16 %v1415
          %v1489 = vunpack.c.l.b16 %v1416
          %v1490 = vunpack.c.l.b16 %v1417
          %vm1491 = vcmask 1041409
          %v1492 = vsel %vm1491, %v1489, %v1487
          %v1493 = vsel %vm1491, %v1490, %v1488
          %v1494 = vpack.c.b16 %v1492, %v1492
          %v1495 = vpack.c.b16 %v1493, %v1493
          %v1562 = vunpack.c.l.b16 %v1419
          %v1563 = vunpack.c.h.b16 %v1419
          %v1564 = vunpack.c.l.b16 %v1420
          %v1565 = vunpack.c.h.b16 %v1420
          %v1566 = vunpack.c.l.b16 %v1421
          %v1567 = vunpack.c.h.b16 %v1421
          %v1568 = vunpack.c.l.b16 %v1422
          %v1569 = vunpack.c.h.b16 %v1422
          %v1570 = vunpack.c.l.b16 %v1423
          %v1571 = vunpack.c.h.b16 %v1423
          %v1572 = vunpack.c.l.b16 %v1424
          %v1573 = vunpack.c.h.b16 %v1424
          %v1574 = vunpack.c.l.b16 %v1425
          %v1575 = vunpack.c.h.b16 %v1425
          %v1576 = vunpack.c.l.b16 %v1426
          %v1577 = vunpack.c.h.b16 %v1426
          %v1578 = vunpack.c.l.b16 %v1427
          %v1579 = vunpack.c.h.b16 %v1427
          %v1580 = vunpack.c.l.b16 %v1428
          %v1581 = vunpack.c.h.b16 %v1428
          %v1582 = vunpack.c.l.b16 %v1429
          %v1583 = vunpack.c.h.b16 %v1429
          %v1584 = vunpack.c.l.b16 %v1430
          %v1585 = vunpack.c.h.b16 %v1430
          %v1586 = vunpack.c.l.b16 %v1431
          %v1587 = vunpack.c.h.b16 %v1431
          %v1588 = vunpack.c.l.b16 %v1432
          %v1589 = vunpack.c.h.b16 %v1432
          %v1590 = vunpack.c.l.b16 %v1433
          %v1591 = vunpack.c.h.b16 %v1433
          %v1592 = vunpack.c.l.b16 %v1434
          %v1593 = vunpack.c.h.b16 %v1434
          %v1594 = vunpack.c.l.b16 %v1435
          %v1595 = vunpack.c.h.b16 %v1435
          %v1596 = vunpack.c.l.b16 %v1436
          %v1597 = vunpack.c.h.b16 %v1436
          %v1598 = vunpack.c.l.b16 %v1437
          %v1599 = vunpack.c.h.b16 %v1437
          %v1600 = vunpack.c.l.b16 %v1438
          %v1601 = vunpack.c.h.b16 %v1438
          %v1602 = vunpack.c.l.b16 %v1439
          %v1603 = vunpack.c.h.b16 %v1439
          %v1604 = vunpack.c.l.b16 %v1440
          %v1605 = vunpack.c.h.b16 %v1440
          %v1606 = vunpack.c.l.b16 %v1441
          %v1607 = vunpack.c.h.b16 %v1441
          %v1608 = vunpack.c.l.b16 %v1442
          %v1609 = vunpack.c.h.b16 %v1442
          %v1610 = vunpack.c.l.b16 %v1443
          %v1611 = vunpack.c.h.b16 %v1443
          %v1612 = vunpack.c.l.b16 %v1444
          %v1613 = vunpack.c.h.b16 %v1444
          %v1614 = vunpack.c.l.b16 %v1445
          %v1615 = vunpack.c.h.b16 %v1445
          %v1616 = vunpack.c.l.b16 %v1446
          %v1617 = vunpack.c.h.b16 %v1446
          %v1618 = vunpack.c.l.b16 %v1447
          %v1619 = vunpack.c.h.b16 %v1447
          %v1620 = vunpack.c.l.b16 %v1448
          %v1621 = vunpack.c.h.b16 %v1448
          %v1622 = vunpack.c.l.b16 %v1449
          %v1623 = vunpack.c.h.b16 %v1449
          %v1624 = vunpack.c.l.b16 %v1450
          %v1625 = vunpack.c.h.b16 %v1450
          %v1626 = vunpack.c.l.b16 %v1451
          %v1627 = vunpack.c.h.b16 %v1451
          %v1628 = vunpack.c.l.b16 %v1452
          %v1629 = vunpack.c.h.b16 %v1452
          %v1630 = vunpack.c.l.b16 %v1453
          %v1631 = vunpack.c.h.b16 %v1453
          %v1632 = vunpack.c.l.b16 %v1454
          %v1633 = vunpack.c.h.b16 %v1454
          %v1634 = vunpack.c.l.b16 %v1455
          %v1635 = vunpack.c.h.b16 %v1455
          %v1636 = vunpack.c.l.b16 %v1456
          %v1637 = vunpack.c.h.b16 %v1456
          %v1638 = vunpack.c.l.b16 %v1457
          %v1639 = vunpack.c.h.b16 %v1457
          %v1640 = vunpack.c.l.b16 %v1458
          %v1641 = vunpack.c.h.b16 %v1458
          %v1642 = vunpack.c.l.b16 %v1459
          %v1643 = vunpack.c.h.b16 %v1459
          %v1644 = vunpack.c.l.b16 %v1460
          %v1645 = vunpack.c.h.b16 %v1460
          %v1646 = vunpack.c.l.b16 %v1461
          %v1647 = vunpack.c.h.b16 %v1461
          %v1648 = vunpack.c.l.b16 %v1462
          %v1649 = vunpack.c.h.b16 %v1462
          %v1650 = vunpack.c.l.b16 %v1463
          %v1651 = vunpack.c.h.b16 %v1463
          %v1652 = vunpack.c.l.b16 %v1464
          %v1653 = vunpack.c.h.b16 %v1464
          %v1654 = vunpack.c.l.b16 %v1465
          %v1655 = vunpack.c.h.b16 %v1465
          %v1656 = vunpack.c.l.b16 %v1466
          %v1657 = vunpack.c.h.b16 %v1466
          %v1658 = vunpack.c.l.b16 %v1467
          %v1659 = vunpack.c.h.b16 %v1467
          %v1660 = vunpack.c.l.b16 %v1468
          %v1661 = vunpack.c.h.b16 %v1468
          %v1662 = vunpack.c.l.b16 %v1469
          %v1663 = vunpack.c.h.b16 %v1469
          %v1664 = vunpack.c.l.b16 %v1470
          %v1665 = vunpack.c.h.b16 %v1470
          %v1666 = vunpack.c.l.b16 %v1471
          %v1667 = vunpack.c.h.b16 %v1471
          %v1668 = vunpack.c.l.b16 %v1472
          %v1669 = vunpack.c.h.b16 %v1472
          %v1670 = vunpack.c.l.b16 %v1473
          %v1671 = vunpack.c.h.b16 %v1473
          %v1672 = vunpack.c.l.b16 %v1474
          %v1673 = vunpack.c.h.b16 %v1474
          %v1674 = vunpack.c.l.b16 %v1475
          %v1675 = vunpack.c.h.b16 %v1475
          %v1676 = vunpack.c.l.b16 %v1476
          %v1677 = vunpack.c.h.b16 %v1476
          %v1678 = vunpack.c.l.b16 %v1477
          %v1679 = vunpack.c.h.b16 %v1477
          %v1680 = vunpack.c.l.b16 %v1478
          %v1681 = vunpack.c.h.b16 %v1478
          %v1682 = vunpack.c.l.b16 %v1479
          %v1683 = vunpack.c.h.b16 %v1479
          %v1684 = vunpack.c.l.b16 %v1480
          %v1685 = vunpack.c.h.b16 %v1480
          %v1686 = vunpack.c.l.b16 %v1481
          %v1687 = vunpack.c.h.b16 %v1481
          %v1688 = vunpack.c.l.b16 %v1482
          %v1689 = vunpack.c.h.b16 %v1482
          %v1690 = vpack.c.b16 %v1566, %v1562
          %v1691 = vpack.c.b16 %v1567, %v1563
          %v1692 = vpack.c.b16 %v1568, %v1564
          %v1693 = vpack.c.b16 %v1569, %v1565
          %v1694 = vpack.c.b16 %v1574, %v1570
          %v1695 = vpack.c.b16 %v1575, %v1571
          %v1696 = vpack.c.b16 %v1576, %v1572
          %v1697 = vpack.c.b16 %v1577, %v1573
          %v1698 = vpack.c.b16 %v1582, %v1578
          %v1699 = vpack.c.b16 %v1583, %v1579
          %v1700 = vpack.c.b16 %v1584, %v1580
          %v1701 = vpack.c.b16 %v1585, %v1581
          %v1702 = vpack.c.b16 %v1590, %v1586
          %v1703 = vpack.c.b16 %v1591, %v1587
          %v1704 = vpack.c.b16 %v1592, %v1588
          %v1705 = vpack.c.b16 %v1593, %v1589
          %v1706 = vpack.c.b16 %v1598, %v1594
          %v1707 = vpack.c.b16 %v1599, %v1595
          %v1708 = vpack.c.b16 %v1600, %v1596
          %v1709 = vpack.c.b16 %v1601, %v1597
          %v1710 = vpack.c.b16 %v1606, %v1602
          %v1711 = vpack.c.b16 %v1607, %v1603
          %v1712 = vpack.c.b16 %v1608, %v1604
          %v1713 = vpack.c.b16 %v1609, %v1605
          %v1714 = vpack.c.b16 %v1614, %v1610
          %v1715 = vpack.c.b16 %v1615, %v1611
          %v1716 = vpack.c.b16 %v1616, %v1612
          %v1717 = vpack.c.b16 %v1617, %v1613
          %v1718 = vpack.c.b16 %v1622, %v1618
          %v1719 = vpack.c.b16 %v1623, %v1619
          %v1720 = vpack.c.b16 %v1624, %v1620
          %v1721 = vpack.c.b16 %v1625, %v1621
          %v1722 = vpack.c.b16 %v1630, %v1626
          %v1723 = vpack.c.b16 %v1631, %v1627
          %v1724 = vpack.c.b16 %v1632, %v1628
          %v1725 = vpack.c.b16 %v1633, %v1629
          %v1726 = vpack.c.b16 %v1638, %v1634
          %v1727 = vpack.c.b16 %v1639, %v1635
          %v1728 = vpack.c.b16 %v1640, %v1636
          %v1729 = vpack.c.b16 %v1641, %v1637
          %v1730 = vpack.c.b16 %v1646, %v1642
          %v1731 = vpack.c.b16 %v1647, %v1643
          %v1732 = vpack.c.b16 %v1648, %v1644
          %v1733 = vpack.c.b16 %v1649, %v1645
          %v1734 = vpack.c.b16 %v1654, %v1650
          %v1735 = vpack.c.b16 %v1655, %v1651
          %v1736 = vpack.c.b16 %v1656, %v1652
          %v1737 = vpack.c.b16 %v1657, %v1653
          %v1738 = vpack.c.b16 %v1662, %v1658
          %v1739 = vpack.c.b16 %v1663, %v1659
          %v1740 = vpack.c.b16 %v1664, %v1660
          %v1741 = vpack.c.b16 %v1665, %v1661
          %v1742 = vpack.c.b16 %v1670, %v1666
          %v1743 = vpack.c.b16 %v1671, %v1667
          %v1744 = vpack.c.b16 %v1672, %v1668
          %v1745 = vpack.c.b16 %v1673, %v1669
          %v1746 = vpack.c.b16 %v1678, %v1674
          %v1747 = vpack.c.b16 %v1679, %v1675
          %v1748 = vpack.c.b16 %v1680, %v1676
          %v1749 = vpack.c.b16 %v1681, %v1677
          %v1750 = vpack.c.b16 %v1686, %v1682
          %v1751 = vpack.c.b16 %v1687, %v1683
          %v1752 = vpack.c.b16 %v1688, %v1684
          %v1753 = vpack.c.b16 %v1689, %v1685
          %1818 = vmatprep.subr.bf16.mxu0 %v1719
          %1819 = vmatpush1.bf16.msra.mxu0 %v1718
          %1820 = vmatprep.subr.bf16.mxu0 %v1715
          %1821 = vmatpush1.bf16.msra.mxu0 %v1714
          %1822 = vmatprep.subr.bf16.mxu0 %v1711
          %1823 = vmatpush1.bf16.msra.mxu0 %v1710
          %1824 = vmatprep.subr.bf16.mxu0 %v1707
          %1825 = vmatpush1.bf16.msra.mxu0 %v1706
          %1826 = vmatprep.subr.bf16.mxu0 %v1703
          %1827 = vmatpush1.bf16.msra.mxu0 %v1702
          %1828 = vmatprep.subr.bf16.mxu0 %v1699
          %1829 = vmatpush1.bf16.msra.mxu0 %v1698
          %1830 = vmatprep.subr.bf16.mxu0 %v1695
          %1831 = vmatpush1.bf16.msra.mxu0 %v1694
          %1832 = vmatprep.subr.bf16.mxu0 %v1691
          %1833 = vmatpush1.bf16.msra.mxu0 %v1690
          %1834 = vmatprep.subr.bf16.mxu0 %v1751
          %1835 = vmatpush2.bf16.msra.mxu0 %v1750
          %1836 = vmatprep.subr.bf16.mxu0 %v1747
          %1837 = vmatpush2.bf16.msra.mxu0 %v1746
          %1838 = vmatprep.subr.bf16.mxu0 %v1743
          %1839 = vmatpush2.bf16.msra.mxu0 %v1742
          %1840 = vmatprep.subr.bf16.mxu0 %v1739
          %1841 = vmatpush2.bf16.msra.mxu0 %v1738
          %1842 = vmatprep.subr.bf16.mxu0 %v1735
          %1843 = vmatpush2.bf16.msra.mxu0 %v1734
          %1844 = vmatprep.subr.bf16.mxu0 %v1731
          %1845 = vmatpush2.bf16.msra.mxu0 %v1730
          %1846 = vmatprep.subr.bf16.mxu0 %v1727
          %1847 = vmatpush2.bf16.msra.mxu0 %v1726
          %1848 = vmatprep.subr.bf16.mxu0 %v1723
          %1849 = vmatpush2.bf16.msra.mxu0 %v1722
          %1850 = vmatprep.mubr.bf16.mxu0 %v1495
          %1851 = vmatmul.mubr.bf16.gmra.mxu0 %v1494
          %v1852 = vpop.f32.mrf.mxu0
          %v1853 = vadd.f32 0.0, %v1852
          %v1854 = vpop.f32.mrf.mxu0
          %v1855 = vadd.f32 0.0, %v1854
          %v1856 = vpop.f32.mrf.mxu0
          %v1857 = vpop.f32.mrf.mxu0
          %1858 = vdwg.mxu0
          %1859 = vmatprep.subr.bf16.mxu0 %v1721
          %1860 = vmatpush1.bf16.msra.mxu0 %v1720
          %1861 = vmatprep.subr.bf16.mxu0 %v1717
          %1862 = vmatpush1.bf16.msra.mxu0 %v1716
          %1863 = vmatprep.subr.bf16.mxu0 %v1713
          %1864 = vmatpush1.bf16.msra.mxu0 %v1712
          %1865 = vmatprep.subr.bf16.mxu0 %v1709
          %1866 = vmatpush1.bf16.msra.mxu0 %v1708
          %1867 = vmatprep.subr.bf16.mxu0 %v1705
          %1868 = vmatpush1.bf16.msra.mxu0 %v1704
          %1869 = vmatprep.subr.bf16.mxu0 %v1701
          %1870 = vmatpush1.bf16.msra.mxu0 %v1700
          %1871 = vmatprep.subr.bf16.mxu0 %v1697
          %1872 = vmatpush1.bf16.msra.mxu0 %v1696
          %1873 = vmatprep.subr.bf16.mxu0 %v1693
          %1874 = vmatpush1.bf16.msra.mxu0 %v1692
          %1875 = vmatprep.subr.bf16.mxu0 %v1753
          %1876 = vmatpush2.bf16.msra.mxu0 %v1752
          %1877 = vmatprep.subr.bf16.mxu0 %v1749
          %1878 = vmatpush2.bf16.msra.mxu0 %v1748
          %1879 = vmatprep.subr.bf16.mxu0 %v1745
          %1880 = vmatpush2.bf16.msra.mxu0 %v1744
          %1881 = vmatprep.subr.bf16.mxu0 %v1741
          %1882 = vmatpush2.bf16.msra.mxu0 %v1740
          %1883 = vmatprep.subr.bf16.mxu0 %v1737
          %1884 = vmatpush2.bf16.msra.mxu0 %v1736
          %1885 = vmatprep.subr.bf16.mxu0 %v1733
          %1886 = vmatpush2.bf16.msra.mxu0 %v1732
          %1887 = vmatprep.subr.bf16.mxu0 %v1729
          %1888 = vmatpush2.bf16.msra.mxu0 %v1728
          %1889 = vmatprep.subr.bf16.mxu0 %v1725
          %1890 = vmatpush2.bf16.msra.mxu0 %v1724
          %1891 = vmatprep.mubr.bf16.mxu0 %v1495
          %1892 = vmatmul.mubr.bf16.gmra.mxu0 %v1494
          %v1893 = vpop.f32.mrf.mxu0
          %v1894 = vadd.f32 0.0, %v1893
          %v1895 = vpop.f32.mrf.mxu0
          %v1896 = vadd.f32 0.0, %v1895
          %v1897 = vpop.f32.mrf.mxu0
          %v1898 = vpop.f32.mrf.mxu0
          %1899 = vdwg.mxu0
          %v1904 = vcombine.low %v1853, %v1855
          %v1905 = vcombine.low %v1894, %v1896
          %v1907 = vunpack.c.l.s4 1983009808
          %v1908 = vunpack.c.0.s8 %v1907
          %v1909 = vlaneseq
          %v1910 = vshrl.u32 %v1909, 7
          %v1911 = vsub.s32 %v1908, %v1910
          %v1912 = vrot.slane %v1904, %v1911
          %v1914 = vunpack.c.l.s4 1983009808
          %v1915 = vunpack.c.0.s8 %v1914
          %v1916 = vlaneseq
          %v1917 = vshrl.u32 %v1916, 7
          %v1918 = vsub.s32 %v1915, %v1917
          %v1919 = vrot.slane %v1905, %v1918
          %v1920 = vcombine.low %v1912, %v1919
          %v1922 = vadd.f32 %v1418, %v1920
          %v1923 = vld [vmem:[#allocation10] sm:$0xf]
          %v1925 = vlaneseq
          %v1926 = vshrl.u32 %v1925, 7
          %v1927 = vsub.s32 0, %v1926
          %v1928 = vrot.slane %v1923, %v1927
          %v1929 = vlaneseq
          %v1930 = vshrl.u32 %v1929, 7
          %v1931 = vsub.s32 1, %v1930
          %v1932 = vrot.slane %v1923, %v1931
          %v1933 = vlaneseq
          %v1934 = vshrl.u32 %v1933, 7
          %v1935 = vsub.s32 2, %v1934
          %v1936 = vrot.slane %v1923, %v1935
          %v1937 = vlaneseq
          %v1938 = vshrl.u32 %v1937, 7
          %v1939 = vsub.s32 3, %v1938
          %v1940 = vrot.slane %v1923, %v1939
          %v1941 = vcombine.low %v1928, %v1932
          %v1942 = vcombine.low %v1936, %v1940
          %v1944 = vunpack.c.l.s4 1983009808
          %v1945 = vunpack.c.0.s8 %v1944
          %v1946 = vlaneseq
          %v1947 = vshrl.u32 %v1946, 7
          %v1948 = vsub.s32 %v1945, %v1947
          %v1949 = vrot.slane %v1941, %v1948
          %v1951 = vunpack.c.l.s4 1983009808
          %v1952 = vunpack.c.0.s8 %v1951
          %v1953 = vlaneseq
          %v1954 = vshrl.u32 %v1953, 7
          %v1955 = vsub.s32 %v1952, %v1954
          %v1956 = vrot.slane %v1942, %v1955
          %v1957 = vcombine.low %v1949, %v1956
          %v1959 = vadd.f32 %v1922, %v1957
          %v1961 = vcombine.high %v1959, %v1959
          %v1963 = vunpack.c.l.s4 1983009808
          %v1964 = vunpack.c.0.s8 %v1963
          %v1965 = vlaneseq
          %v1966 = vshrl.u32 %v1965, 7
          %v1967 = vsub.s32 %v1964, %v1966
          %v1968 = vrot.slane %v1959, %v1967
          %v1970 = vunpack.c.l.s4 1983009808
          %v1971 = vunpack.c.0.s8 %v1970
          %v1972 = vlaneseq
          %v1973 = vshrl.u32 %v1972, 7
          %v1974 = vsub.s32 %v1971, %v1973
          %v1975 = vrot.slane %v1961, %v1974
          %v1976 = vcombine.high %v1968, %v1968
          %v1977 = vcombine.high %v1975, %v1975
          %v1982 = vpack.c.bf16 %v1968, %v1968
          %v1983 = vpack.c.bf16 %v1976, %v1976
          %v1984 = vpack.c.bf16 %v1975, %v1975
          %v1985 = vpack.c.bf16 %v1977, %v1977
          %v1986 = vld [vmem:[#allocation12] sm:$0xf]
          %v1987 = vld [vmem:[#allocation12 + $0x4] sm:$0xf]
          %v1988 = vld [vmem:[#allocation12 + $0x8] sm:$0xf]
          %v1989 = vld [vmem:[#allocation12 + $0xc] sm:$0xf]
          %v1990 = vld [vmem:[#allocation12 + $0x10] sm:$0xf]
          %v1991 = vld [vmem:[#allocation12 + $0x14] sm:$0xf]
          %v1992 = vld [vmem:[#allocation12 + $0x18] sm:$0xf]
          %v1993 = vld [vmem:[#allocation12 + $0x1c] sm:$0xf]
          %v1994 = vld [vmem:[#allocation12 + $0x20] sm:$0xf]
          %v1995 = vld [vmem:[#allocation12 + $0x24] sm:$0xf]
          %v1996 = vld [vmem:[#allocation12 + $0x28] sm:$0xf]
          %v1997 = vld [vmem:[#allocation12 + $0x2c] sm:$0xf]
          %v1998 = vld [vmem:[#allocation12 + $0x30] sm:$0xf]
          %v1999 = vld [vmem:[#allocation12 + $0x34] sm:$0xf]
          %v2000 = vld [vmem:[#allocation12 + $0x38] sm:$0xf]
          %v2001 = vld [vmem:[#allocation12 + $0x3c] sm:$0xf]
          %v2002 = vld [vmem:[#allocation12 + $0x40] sm:$0xf]
          %v2003 = vld [vmem:[#allocation12 + $0x44] sm:$0xf]
          %v2004 = vld [vmem:[#allocation12 + $0x48] sm:$0xf]
          %v2005 = vld [vmem:[#allocation12 + $0x4c] sm:$0xf]
          %v2006 = vld [vmem:[#allocation12 + $0x50] sm:$0xf]
          %v2007 = vld [vmem:[#allocation12 + $0x54] sm:$0xf]
          %v2008 = vld [vmem:[#allocation12 + $0x58] sm:$0xf]
          %v2009 = vld [vmem:[#allocation12 + $0x5c] sm:$0xf]
          %v2010 = vld [vmem:[#allocation12 + $0x60] sm:$0xf]
          %v2011 = vld [vmem:[#allocation12 + $0x64] sm:$0xf]
          %v2012 = vld [vmem:[#allocation12 + $0x68] sm:$0xf]
          %v2013 = vld [vmem:[#allocation12 + $0x6c] sm:$0xf]
          %v2014 = vld [vmem:[#allocation12 + $0x70] sm:$0xf]
          %v2015 = vld [vmem:[#allocation12 + $0x74] sm:$0xf]
          %v2016 = vld [vmem:[#allocation12 + $0x78] sm:$0xf]
          %v2017 = vld [vmem:[#allocation12 + $0x7c] sm:$0xf]
          %v2018 = vld [vmem:[#allocation12 + $0x80] sm:$0xf]
          %v2019 = vld [vmem:[#allocation12 + $0x84] sm:$0xf]
          %v2020 = vld [vmem:[#allocation12 + $0x88] sm:$0xf]
          %v2021 = vld [vmem:[#allocation12 + $0x8c] sm:$0xf]
          %v2022 = vld [vmem:[#allocation12 + $0x90] sm:$0xf]
          %v2023 = vld [vmem:[#allocation12 + $0x94] sm:$0xf]
          %v2024 = vld [vmem:[#allocation12 + $0x98] sm:$0xf]
          %v2025 = vld [vmem:[#allocation12 + $0x9c] sm:$0xf]
          %v2026 = vld [vmem:[#allocation12 + $0xa0] sm:$0xf]
          %v2027 = vld [vmem:[#allocation12 + $0xa4] sm:$0xf]
          %v2028 = vld [vmem:[#allocation12 + $0xa8] sm:$0xf]
          %v2029 = vld [vmem:[#allocation12 + $0xac] sm:$0xf]
          %v2030 = vld [vmem:[#allocation12 + $0xb0] sm:$0xf]
          %v2031 = vld [vmem:[#allocation12 + $0xb4] sm:$0xf]
          %v2032 = vld [vmem:[#allocation12 + $0xb8] sm:$0xf]
          %v2033 = vld [vmem:[#allocation12 + $0xbc] sm:$0xf]
          %v2034 = vld [vmem:[#allocation12 + $0xc0] sm:$0xf]
          %v2035 = vld [vmem:[#allocation12 + $0xc4] sm:$0xf]
          %v2036 = vld [vmem:[#allocation12 + $0xc8] sm:$0xf]
          %v2037 = vld [vmem:[#allocation12 + $0xcc] sm:$0xf]
          %v2038 = vld [vmem:[#allocation12 + $0xd0] sm:$0xf]
          %v2039 = vld [vmem:[#allocation12 + $0xd4] sm:$0xf]
          %v2040 = vld [vmem:[#allocation12 + $0xd8] sm:$0xf]
          %v2041 = vld [vmem:[#allocation12 + $0xdc] sm:$0xf]
          %v2042 = vld [vmem:[#allocation12 + $0xe0] sm:$0xf]
          %v2043 = vld [vmem:[#allocation12 + $0xe4] sm:$0xf]
          %v2044 = vld [vmem:[#allocation12 + $0xe8] sm:$0xf]
          %v2045 = vld [vmem:[#allocation12 + $0xec] sm:$0xf]
          %v2046 = vld [vmem:[#allocation12 + $0xf0] sm:$0xf]
          %v2047 = vld [vmem:[#allocation12 + $0xf4] sm:$0xf]
          %v2048 = vld [vmem:[#allocation12 + $0xf8] sm:$0xf]
          %v2049 = vld [vmem:[#allocation12 + $0xfc] sm:$0xf]
          %v2050 = vld [vmem:[#allocation13] sm:$0x1]
          %v2052 = vlaneseq
          %v2053 = vshrl.u32 %v2052, 7
          %v2054 = vsub.s32 0, %v2053
          %v2055 = vrot.slane %v2050, %v2054
          %v2121 = vunpack.c.l.b16 %v1986
          %v2122 = vunpack.c.l.b16 %v1987
          %v2123 = vunpack.c.l.b16 %v1988
          %v2124 = vunpack.c.l.b16 %v1989
          %v2125 = vunpack.c.l.b16 %v1990
          %v2126 = vunpack.c.l.b16 %v1991
          %v2127 = vunpack.c.l.b16 %v1992
          %v2128 = vunpack.c.l.b16 %v1993
          %v2129 = vunpack.c.l.b16 %v1994
          %v2130 = vunpack.c.l.b16 %v1995
          %v2131 = vunpack.c.l.b16 %v1996
          %v2132 = vunpack.c.l.b16 %v1997
          %v2133 = vunpack.c.l.b16 %v1998
          %v2134 = vunpack.c.l.b16 %v1999
          %v2135 = vunpack.c.l.b16 %v2000
          %v2136 = vunpack.c.l.b16 %v2001
          %v2137 = vunpack.c.l.b16 %v2002
          %v2138 = vunpack.c.l.b16 %v2003
          %v2139 = vunpack.c.l.b16 %v2004
          %v2140 = vunpack.c.l.b16 %v2005
          %v2141 = vunpack.c.l.b16 %v2006
          %v2142 = vunpack.c.l.b16 %v2007
          %v2143 = vunpack.c.l.b16 %v2008
          %v2144 = vunpack.c.l.b16 %v2009
          %v2145 = vunpack.c.l.b16 %v2010
          %v2146 = vunpack.c.l.b16 %v2011
          %v2147 = vunpack.c.l.b16 %v2012
          %v2148 = vunpack.c.l.b16 %v2013
          %v2149 = vunpack.c.l.b16 %v2014
          %v2150 = vunpack.c.l.b16 %v2015
          %v2151 = vunpack.c.l.b16 %v2016
          %v2152 = vunpack.c.l.b16 %v2017
          %v2153 = vunpack.c.l.b16 %v2018
          %v2154 = vunpack.c.l.b16 %v2019
          %v2155 = vunpack.c.l.b16 %v2020
          %v2156 = vunpack.c.l.b16 %v2021
          %v2157 = vunpack.c.l.b16 %v2022
          %v2158 = vunpack.c.l.b16 %v2023
          %v2159 = vunpack.c.l.b16 %v2024
          %v2160 = vunpack.c.l.b16 %v2025
          %v2161 = vunpack.c.l.b16 %v2026
          %v2162 = vunpack.c.l.b16 %v2027
          %v2163 = vunpack.c.l.b16 %v2028
          %v2164 = vunpack.c.l.b16 %v2029
          %v2165 = vunpack.c.l.b16 %v2030
          %v2166 = vunpack.c.l.b16 %v2031
          %v2167 = vunpack.c.l.b16 %v2032
          %v2168 = vunpack.c.l.b16 %v2033
          %v2169 = vunpack.c.l.b16 %v2034
          %v2170 = vunpack.c.l.b16 %v2035
          %v2171 = vunpack.c.l.b16 %v2036
          %v2172 = vunpack.c.l.b16 %v2037
          %v2173 = vunpack.c.l.b16 %v2038
          %v2174 = vunpack.c.l.b16 %v2039
          %v2175 = vunpack.c.l.b16 %v2040
          %v2176 = vunpack.c.l.b16 %v2041
          %v2177 = vunpack.c.l.b16 %v2042
          %v2178 = vunpack.c.l.b16 %v2043
          %v2179 = vunpack.c.l.b16 %v2044
          %v2180 = vunpack.c.l.b16 %v2045
          %v2181 = vunpack.c.l.b16 %v2046
          %v2182 = vunpack.c.l.b16 %v2047
          %v2183 = vunpack.c.l.b16 %v2048
          %v2184 = vunpack.c.l.b16 %v2049
          %v2185 = vpack.c.b16 %v2122, %v2121
          %v2186 = vpack.c.b16 %v2124, %v2123
          %v2187 = vpack.c.b16 %v2126, %v2125
          %v2188 = vpack.c.b16 %v2128, %v2127
          %v2189 = vpack.c.b16 %v2130, %v2129
          %v2190 = vpack.c.b16 %v2132, %v2131
          %v2191 = vpack.c.b16 %v2134, %v2133
          %v2192 = vpack.c.b16 %v2136, %v2135
          %v2193 = vpack.c.b16 %v2138, %v2137
          %v2194 = vpack.c.b16 %v2140, %v2139
          %v2195 = vpack.c.b16 %v2142, %v2141
          %v2196 = vpack.c.b16 %v2144, %v2143
          %v2197 = vpack.c.b16 %v2146, %v2145
          %v2198 = vpack.c.b16 %v2148, %v2147
          %v2199 = vpack.c.b16 %v2150, %v2149
          %v2200 = vpack.c.b16 %v2152, %v2151
          %v2201 = vpack.c.b16 %v2154, %v2153
          %v2202 = vpack.c.b16 %v2156, %v2155
          %v2203 = vpack.c.b16 %v2158, %v2157
          %v2204 = vpack.c.b16 %v2160, %v2159
          %v2205 = vpack.c.b16 %v2162, %v2161
          %v2206 = vpack.c.b16 %v2164, %v2163
          %v2207 = vpack.c.b16 %v2166, %v2165
          %v2208 = vpack.c.b16 %v2168, %v2167
          %v2209 = vpack.c.b16 %v2170, %v2169
          %v2210 = vpack.c.b16 %v2172, %v2171
          %v2211 = vpack.c.b16 %v2174, %v2173
          %v2212 = vpack.c.b16 %v2176, %v2175
          %v2213 = vpack.c.b16 %v2178, %v2177
          %v2214 = vpack.c.b16 %v2180, %v2179
          %v2215 = vpack.c.b16 %v2182, %v2181
          %v2216 = vpack.c.b16 %v2184, %v2183
          %2249 = vmatprep.subr.bf16.mxu0 0
          %2250 = vmatpush1.bf16.msra.mxu0 %v2192
          %2251 = vmatprep.subr.bf16.mxu0 0
          %2252 = vmatpush1.bf16.msra.mxu0 %v2191
          %2253 = vmatprep.subr.bf16.mxu0 0
          %2254 = vmatpush1.bf16.msra.mxu0 %v2190
          %2255 = vmatprep.subr.bf16.mxu0 0
          %2256 = vmatpush1.bf16.msra.mxu0 %v2189
          %2257 = vmatprep.subr.bf16.mxu0 0
          %2258 = vmatpush1.bf16.msra.mxu0 %v2188
          %2259 = vmatprep.subr.bf16.mxu0 0
          %2260 = vmatpush1.bf16.msra.mxu0 %v2187
          %2261 = vmatprep.subr.bf16.mxu0 0
          %2262 = vmatpush1.bf16.msra.mxu0 %v2186
          %2263 = vmatprep.subr.bf16.mxu0 0
          %2264 = vmatpush1.bf16.msra.mxu0 %v2185
          %2265 = vmatprep.subr.bf16.mxu0 0
          %2266 = vmatpush2.bf16.msra.mxu0 %v2200
          %2267 = vmatprep.subr.bf16.mxu0 0
          %2268 = vmatpush2.bf16.msra.mxu0 %v2199
          %2269 = vmatprep.subr.bf16.mxu0 0
          %2270 = vmatpush2.bf16.msra.mxu0 %v2198
          %2271 = vmatprep.subr.bf16.mxu0 0
          %2272 = vmatpush2.bf16.msra.mxu0 %v2197
          %2273 = vmatprep.subr.bf16.mxu0 0
          %2274 = vmatpush2.bf16.msra.mxu0 %v2196
          %2275 = vmatprep.subr.bf16.mxu0 0
          %2276 = vmatpush2.bf16.msra.mxu0 %v2195
          %2277 = vmatprep.subr.bf16.mxu0 0
          %2278 = vmatpush2.bf16.msra.mxu0 %v2194
          %2279 = vmatprep.subr.bf16.mxu0 0
          %2280 = vmatpush2.bf16.msra.mxu0 %v2193
          %2281 = vmatprep.mubr.bf16.mxu0 %v1983
          %2282 = vmatmul.mubr.bf16.gmra.mxu0 %v1982
          %v2283 = vpop.f32.mrf.mxu0
          %v2284 = vadd.f32 %v2055, %v2283
          %v2285 = vpop.f32.mrf.mxu0
          %v2286 = vpop.f32.mrf.mxu0
          %v2287 = vpop.f32.mrf.mxu0
          %2288 = vdwg.mxu0
          %2289 = vmatprep.subr.bf16.mxu0 0
          %2290 = vmatpush1.bf16.msra.mxu0 %v2208
          %2291 = vmatprep.subr.bf16.mxu0 0
          %2292 = vmatpush1.bf16.msra.mxu0 %v2207
          %2293 = vmatprep.subr.bf16.mxu0 0
          %2294 = vmatpush1.bf16.msra.mxu0 %v2206
          %2295 = vmatprep.subr.bf16.mxu0 0
          %2296 = vmatpush1.bf16.msra.mxu0 %v2205
          %2297 = vmatprep.subr.bf16.mxu0 0
          %2298 = vmatpush1.bf16.msra.mxu0 %v2204
          %2299 = vmatprep.subr.bf16.mxu0 0
          %2300 = vmatpush1.bf16.msra.mxu0 %v2203
          %2301 = vmatprep.subr.bf16.mxu0 0
          %2302 = vmatpush1.bf16.msra.mxu0 %v2202
          %2303 = vmatprep.subr.bf16.mxu0 0
          %2304 = vmatpush1.bf16.msra.mxu0 %v2201
          %2305 = vmatprep.subr.bf16.mxu0 0
          %2306 = vmatpush2.bf16.msra.mxu0 %v2216
          %2307 = vmatprep.subr.bf16.mxu0 0
          %2308 = vmatpush2.bf16.msra.mxu0 %v2215
          %2309 = vmatprep.subr.bf16.mxu0 0
          %2310 = vmatpush2.bf16.msra.mxu0 %v2214
          %2311 = vmatprep.subr.bf16.mxu0 0
          %2312 = vmatpush2.bf16.msra.mxu0 %v2213
          %2313 = vmatprep.subr.bf16.mxu0 0
          %2314 = vmatpush2.bf16.msra.mxu0 %v2212
          %2315 = vmatprep.subr.bf16.mxu0 0
          %2316 = vmatpush2.bf16.msra.mxu0 %v2211
          %2317 = vmatprep.subr.bf16.mxu0 0
          %2318 = vmatpush2.bf16.msra.mxu0 %v2210
          %2319 = vmatprep.subr.bf16.mxu0 0
          %2320 = vmatpush2.bf16.msra.mxu0 %v2209
          %2321 = vmatprep.mubr.bf16.mxu0 %v1985
          %2322 = vmatmul.mubr.bf16.gmra.mxu0 %v1984
          %v2323 = vpop.f32.mrf.mxu0
          %v2324 = vadd.f32 %v2284, %v2323
          %v2325 = vpop.f32.mrf.mxu0
          %v2326 = vpop.f32.mrf.mxu0
          %v2327 = vpop.f32.mrf.mxu0
          %2328 = vdwg.mxu0
          %2329 = vst [vmem:[#allocation15] sm:$0x3] %v2324
        $region84: #{tpu_custom_call.1} parent=47 // pred_fallthru
          _
        // Predicated region
        $region85: #{tpu_custom_call.1} parent=47 // pred_check
          %p2330 = pneg %p195
        $region86: #{tpu_custom_call.1} parent=47 // pred_check_branch
          %2332 = sbr.rel (%p2330) target = $region88
        $region87: #{tpu_custom_call.1} parent=47 // pred_region
          %s2334 = ssub.s32 32, 32
          %2335 = vsyncadd [#allocation5], %s2334
          %s2337 = sshll.u32 [#allocation15], 4
          %s2338 = int_to_ptr.vmem [resolvable:$true] %s2337
          %2340 = dma.vmem_to_hbm [thread:$0]  %s2338, 32, %s7, [#allocation5]
        $region88: #{tpu_custom_call.1} parent=47 // pred_fallthru
          _
        // Predicated region
        $region89: #{tpu_custom_call.1} parent=47 // pred_check
          %p2341 = pneg %p195
        $region90: #{tpu_custom_call.1} parent=47 // pred_check_branch
          %2343 = sbr.rel (%p2341) target = $region92
        $region91: #{tpu_custom_call.1} parent=47 // pred_region
          %2344 = dma.done [#allocation5], 32
        $region92: #{tpu_custom_call.1} parent=47 // pred_fallthru
          _
      $region48: #{tpu_custom_call.1} parent=5 // pred_fallthru
        _
      %p2345 = scmp.le.s32.totalorder 2, %s20
      // Predicated region
      $region93: #{tpu_custom_call.1} parent=5 // pred_check
        %p2346 = pneg %p2345
      $region94: #{tpu_custom_call.1} parent=5 // pred_check_branch
        %2348 = sbr.rel (%p2346) target = $region96
      $region95: #{tpu_custom_call.1} parent=5 // pred_region
        %s2349 = ssub.s32 %s20, 2
      $region96: #{tpu_custom_call.1} parent=5 // pred_fallthru
        _
    $region6: #{tpu_custom_call.1} parent=1 // loop_footer
      %s24 = sadd.s32 1, %s20
    $region7: #{tpu_custom_call.1} parent=1 // loop_footer_branch
      %19 = sbr.rel target = $region3
    $region8: #{tpu_custom_call.1} parent=1 // loop_exit
      _
    %2350 = vsyncpa [#allocation4], 1
    %s2351 = scalar_lea.sflag [#allocation4], 1
    %2352 = vsyncpa %s2351, 1
    %2353 = vsyncpa [#allocation7], 1
    %2354 = vsyncpa [#allocation11], 1
    %2355 = vsyncpa [#allocation14], 1
    %2356 = vsyncpa [#allocation5], 1
    %s2357 = scalar_lea.sflag [#allocation5], 1
    %2358 = vsyncpa %s2357, 1

</llo_original>
